<compile_context>
chip_gen: v7x
topology: tpu7x:2x2x1
jax: 0.10.0
libtpu: 0.0.40
codegen_flags: <defaults>
</compile_context>

<pallas_src>
import functools
import math

import jax
import jax.numpy as jnp
from jax import lax
from jax.experimental import pallas as pl
from jax.experimental.pallas import tpu as pltpu

BN_EPS = 1e-5
KSIZE = 5
STRIDE = 2
PAD = 2
LANE = 128


def _vmem_spec():
    return pl.BlockSpec(memory_space=pltpu.MemorySpace.VMEM)


# ---------------------------------------------------------------------------
# Fused Pallas kernel: conv1+BN+ReLU -> conv2+BN+ReLU -> conv3+BN+ReLU
# -> AvgPool2d(4) -> Linear -> Tanh.  Gridless, activations never leave VMEM.
# ---------------------------------------------------------------------------
def encoder_kernel(*refs, batch, hs, ws, cps, counts):
    x_ref = refs[0]
    p_ref, wl_ref, bl_ref, o_ref = refs[13], refs[14], refs[15], refs[16]

    a = x_ref[...].astype(jnp.bfloat16)                  # [B*H_in, W_in*C_pad]
    for li in range(3):
        s_ref, m_ref, gam_ref, bet_ref = refs[1 + 4 * li: 5 + 4 * li]
        h_out, w_out, c_pad = hs[li], ws[li], cps[li]
        rows = batch * h_out

        # (1) one-hot row-tap selection: absorbs the H taps, stride, H zero-
        #     padding and the batch stacking (exact in bf16).
        taps = jnp.dot(s_ref[...], a, preferred_element_type=jnp.float32)
        # (2) lay the 5 kh tap slabs side by side in lanes -> [B*h_out, 5*L_in]
        taps = jnp.concatenate(
            [taps[kh * rows:(kh + 1) * rows, :] for kh in range(KSIZE)], axis=1)
        # (3) single fused band matmul (K = 5*L_in): the stacked band matrix
        #     absorbs the W taps, stride, W zero-padding and channel padding.
        y = jnp.dot(taps.astype(jnp.bfloat16), m_ref[...],
                    preferred_element_type=jnp.float32)  # [B*h_out, w_out*c_pad]

        # Training-mode BatchNorm, single pass (var = E[x^2] - mean^2).
        # NOTE: the conv bias is intentionally omitted -- BN subtracts the
        # per-channel batch mean right here, so it cancels exactly.
        col_sum = jnp.sum(y, axis=0, keepdims=True)      # [1, w_out*c_pad]
        col_sq = jnp.sum(y * y, axis=0, keepdims=True)
        # Sum over the w_out lane-groups of c_pad channels with an XLU
        # roll-and-add butterfly (w_out is a power of two and the lane dim is
        # exactly w_out*c_pad), leaving per-channel totals broadcast back onto
        # the (w, c) lane layout.
        shift = c_pad
        while shift < c_pad * w_out:
            col_sum = col_sum + pltpu.roll(col_sum, shift, 1)
            col_sq = col_sq + pltpu.roll(col_sq, shift, 1)
            shift *= 2
        inv_n = 1.0 / counts[li]
        mean = col_sum * inv_n
        var = col_sq * inv_n - mean * mean
        scale = gam_ref[...] * lax.rsqrt(var + BN_EPS)   # = 0 on padded lanes
        offs = bet_ref[...] - mean * scale
        a = jnp.maximum(y * scale + offs, 0.0).astype(jnp.bfloat16)

    # AvgPool2d(4) + Flatten + Linear + Tanh.  P folds the 1/h_out part of the
    # average and the per-batch row pooling; wl folds the 1/w_out part and the
    # (w, c) lane layout.  Single full-tile output store.
    pooled = jnp.dot(p_ref[...], a, preferred_element_type=jnp.float32)
    z = jnp.dot(pooled.astype(jnp.bfloat16), wl_ref[...],
                preferred_element_type=jnp.float32)
    o_ref[...] = jnp.tanh(z + bl_ref[...])


# ---------------------------------------------------------------------------
# Constant construction (conv geometry encoded as small matmul operands).
# ---------------------------------------------------------------------------
def _padded_channels(c, w_out):
    q = LANE // math.gcd(w_out, LANE)      # smallest pad s.t. w_out*c_pad % 128 == 0
    return ((c + q - 1) // q) * q


def _row_select_stacked(h_in, h_out, batch):
    """One-hot [5*B*h_out, B*h_in]: row (kh, b, i) selects input row
    b*h_in + (2*i + kh - 2); out-of-range taps -> all-zero row (H padding)."""
    i = jnp.arange(h_out)
    kh = jnp.arange(KSIZE)
    b = jnp.arange(batch)
    src = STRIDE * i[None, None, :] + kh[:, None, None] - PAD      # [K,1,h_out]
    src = jnp.broadcast_to(src, (KSIZE, batch, h_out))
    valid = (src >= 0) & (src < h_in)
    col = (b[None, :, None] * h_in + src).reshape(-1)
    valid = valid.reshape(-1)
    onehot = (col[:, None] == jnp.arange(batch * h_in)[None, :]) & valid[:, None]
    return onehot.astype(jnp.bfloat16)


def _pool_rows(batch, h_out):
    """[B, B*h_out] with 1/h_out inside each batch block (row part of AvgPool)."""
    r = jnp.arange(batch * h_out)
    onehot = (r[None, :] // h_out) == jnp.arange(batch)[:, None]
    return (onehot.astype(jnp.float32) / float(h_out)).astype(jnp.bfloat16)


def _band_matrix_fused(wgt, w_in, w_out, cin_p, cout_p):
    """Fused band matrix [5*w_in*cin_p, w_out*cout_p]:
    M[kh*L + w*cin_p + c, j*cout_p + o] = wgt[kh, kw, c, o], kw = w + 2 - 2*j
    (zero outside the kernel window and on padded channels)."""
    k, _, cin, cout = wgt.shape
    kw = jnp.arange(k)
    wc = jnp.arange(w_in)
    jc = jnp.arange(w_out)
    taps = (wc[None, :, None] + PAD ==
            STRIDE * jc[None, None, :] + kw[:, None, None]).astype(wgt.dtype)
    m = jnp.einsum('hkcv,kwj->hwcjv', wgt, taps)   # [k, w_in, cin, w_out, cout]
    m = jnp.pad(m, ((0, 0), (0, 0), (0, cin_p - cin), (0, 0), (0, cout_p - cout)))
    return m.reshape(k * w_in * cin_p, w_out * cout_p).astype(jnp.bfloat16)


def _lane_bcast(v, c_pad, w_out):
    vp = jnp.zeros((c_pad,), jnp.float32).at[:v.shape[0]].set(v)
    return jnp.tile(vp, w_out)[None, :]


def prepare_encoder(params, z_amort, height, width):
    """One-time, batch-independent weight prep (hoisted out of the hot path)."""
    h, w = height, width
    w1, w2, w3 = params["w1"], params["w2"], params["w3"]
    f1, f2, f3 = w1.shape[-1], w2.shape[-1], w3.shape[-1]
    latent_dim = params["wl"].shape[-1]

    v1, v2, v3 = w // 2, w // 4, w // 8
    c0 = _padded_channels(z_amort, w)
    c1 = _padded_channels(f1, v1)
    c2 = _padded_channels(f2, v2)
    c3 = _padded_channels(f3, v3)
    dp = ((latent_dim + LANE - 1) // LANE) * LANE

    wl_p = jnp.zeros((c3, dp), jnp.float32).at[:f3, :latent_dim].set(params["wl"])
    return dict(
        m1=_band_matrix_fused(w1, w, v1, c0, c1),
        m2=_band_matrix_fused(w2, v1, v2, c1, c2),
        m3=_band_matrix_fused(w3, v2, v3, c2, c3),
        gam1=_lane_bcast(params["g1"], c1, v1), bet1=_lane_bcast(params["be1"], c1, v1),
        gam2=_lane_bcast(params["g2"], c2, v2), bet2=_lane_bcast(params["be2"], c2, v2),
        gam3=_lane_bcast(params["g3"], c3, v3), bet3=_lane_bcast(params["be3"], c3, v3),
        wl=(jnp.tile(wl_p, (v3, 1)) / float(v3)).astype(jnp.bfloat16),
        bl=jnp.zeros((1, dp), jnp.float32).at[0, :latent_dim].set(params["bl"]),
    )


def latent_state_encoder_forward(x_nchw, prep, *, z_amort, latent_dim):
    b_sz, _, h, w = x_nchw.shape
    assert h == w and h % 8 == 0 and h // 8 == 4, (
        "AvgPool2d(4) + Linear(4*F) implies a 32x32 input (4x4 final map)")
    h1, h2, h3 = h // 2, h // 4, h // 8
    v1, v2, v3 = w // 2, w // 4, w // 8
    assert all(v & (v - 1) == 0 for v in (v1, v2, v3)), "butterfly needs pow-2 widths"

    c0 = _padded_channels(z_amort, w)
    c1 = prep["gam1"].shape[1] // v1
    c2 = prep["gam2"].shape[1] // v2
    c3 = prep["gam3"].shape[1] // v3
    dp = prep["bl"].shape[1]

    # x[:, :z_amort], NCHW -> NHWC, zero-pad channels so W*C_pad % 128 == 0,
    # and stack the batch into the sublane axis: one [B*H, W*C_pad] tile.
    x = jnp.transpose(x_nchw[:, :z_amort], (0, 2, 3, 1)).astype(jnp.float32)
    x = jnp.pad(x, ((0, 0), (0, 0), (0, 0), (0, c0 - z_amort)))
    x = x.reshape(b_sz * h, w * c0)

    # Batch-dependent one-hot selection / pooling matrices: pure functions of
    # static shapes, so XLA constant-folds them at compile time under jit.
    args = [
        x,
        _row_select_stacked(h, h1, b_sz), prep["m1"], prep["gam1"], prep["bet1"],
        _row_select_stacked(h1, h2, b_sz), prep["m2"], prep["gam2"], prep["bet2"],
        _row_select_stacked(h2, h3, b_sz), prep["m3"], prep["gam3"], prep["bet3"],
        _pool_rows(b_sz, h3), prep["wl"], prep["bl"],
    ]
    kernel = functools.partial(
        encoder_kernel, batch=b_sz, hs=(h1, h2, h3), ws=(v1, v2, v3),
        cps=(c1, c2, c3),
        counts=(float(b_sz * h1 * v1), float(b_sz * h2 * v2), float(b_sz * h3 * v3)))
    out = pl.pallas_call(
        kernel,
        out_shape=jax.ShapeDtypeStruct((b_sz, dp), jnp.float32),
        in_specs=[_vmem_spec()] * len(args),
        out_specs=_vmem_spec(),
    )(*args)
    return out[:, :latent_dim]


# ---------------------------------------------------------------------------
# Parameters + pure-JAX reference (with conv bias, to verify the cancellation).
# ---------------------------------------------------------------------------
def init_params(key, z_amort, num_filters, latent_dim):
    f = num_filters
    ks = jax.random.split(key, 14)

    def conv_w(k, cin, cout):
        return jax.random.normal(k, (KSIZE, KSIZE, cin, cout), jnp.float32) / math.sqrt(
            KSIZE * KSIZE * cin)

    return dict(
        w1=conv_w(ks[0], z_amort, f),
        b1=0.1 * jax.random.normal(ks[1], (f,), jnp.float32),
        g1=1.0 + 0.1 * jax.random.normal(ks[2], (f,), jnp.float32),
        be1=0.1 * jax.random.normal(ks[3], (f,), jnp.float32),
        w2=conv_w(ks[4], f, 2 * f),
        b2=0.1 * jax.random.normal(ks[5], (2 * f,), jnp.float32),
        g2=1.0 + 0.1 * jax.random.normal(ks[6], (2 * f,), jnp.float32),
        be2=0.1 * jax.random.normal(ks[7], (2 * f,), jnp.float32),
        w3=conv_w(ks[8], 2 * f, 4 * f),
        b3=0.1 * jax.random.normal(ks[9], (4 * f,), jnp.float32),
        g3=1.0 + 0.1 * jax.random.normal(ks[10], (4 * f,), jnp.float32),
        be3=0.1 * jax.random.normal(ks[11], (4 * f,), jnp.float32),
        wl=jax.random.normal(ks[12], (4 * f, latent_dim), jnp.float32) / math.sqrt(4 * f),
        bl=0.1 * jax.random.normal(ks[13], (latent_dim,), jnp.float32),
    )


def reference_forward(x_nchw, params, z_amort):
    x = jnp.transpose(x_nchw[:, :z_amort], (0, 2, 3, 1)).astype(jnp.float32)

    def conv_bn_relu(x, wgt, b, g, be):
        y = lax.conv_general_dilated(
            x, wgt, (STRIDE, STRIDE), [(PAD, PAD), (PAD, PAD)],
            dimension_numbers=("NHWC", "HWIO", "NHWC"),
            precision=lax.Precision.HIGHEST) + b
        mean = jnp.mean(y, axis=(0, 1, 2), keepdims=True)
        var = jnp.mean((y - mean) ** 2, axis=(0, 1, 2), keepdims=True)
        y = (y - mean) * lax.rsqrt(var + BN_EPS) * g + be
        return jnp.maximum(y, 0.0)

    hh = conv_bn_relu(x, params["w1"], params["b1"], params["g1"], params["be1"])
    hh = conv_bn_relu(hh, params["w2"], params["b2"], params["g2"], params["be2"])
    hh = conv_bn_relu(hh, params["w3"], params["b3"], params["g3"], params["be3"])
    pooled = jnp.mean(hh, axis=(1, 2))                  # AvgPool2d(4) + Flatten
    return jnp.tanh(pooled @ params["wl"] + params["bl"])


if __name__ == "__main__":
    batch, z_amort, num_filters, latent_dim = 2, 3, 8, 8
    height = width = 32          # 32 -> 16 -> 8 -> 4, then AvgPool2d(4) -> 1x1
    seq_channels = 5             # GenerationLen * NumChannels (> z_amort)

    key = jax.random.PRNGKey(0)
    kx, kp = jax.random.split(key)
    x = jax.random.normal(kx, (batch, seq_channels, height, width), jnp.float32)
    params = init_params(kp, z_amort, num_filters, latent_dim)

    prep = prepare_encoder(params, z_amort, height, width)   # one-time weight prep
    fwd = jax.jit(functools.partial(latent_state_encoder_forward,
                                    z_amort=z_amort, latent_dim=latent_dim))
    z0 = jax.block_until_ready(fwd(x, prep))
    assert z0.shape == (batch, latent_dim)

    ref = reference_forward(x, params, z_amort)
    max_diff = float(jnp.max(jnp.abs(z0 - ref)))
    # Tolerance widened from 5e-3 to 2e-2: the kernel now feeds the MXU bf16
    # operands (per the perf review) while the reference uses f32 HIGHEST.
    if max_diff > 2e-2:
        raise AssertionError(f"kernel/reference mismatch, max |diff| = {max_diff}")
    print("KERNEL_OK")
</pallas_src>

<mosaic_0001>
module attributes {stable_mosaic.version = 11 : i64} {
  func.func @encoder_kernel(%arg0: memref<64x128xf32, #tpu.memory_space<vmem>>, %arg1: memref<160x64xbf16, #tpu.memory_space<vmem>>, %arg2: memref<640x128xbf16, #tpu.memory_space<vmem>>, %arg3: memref<1x128xf32, #tpu.memory_space<vmem>>, %arg4: memref<1x128xf32, #tpu.memory_space<vmem>>, %arg5: memref<80x32xbf16, #tpu.memory_space<vmem>>, %arg6: memref<640x128xbf16, #tpu.memory_space<vmem>>, %arg7: memref<1x128xf32, #tpu.memory_space<vmem>>, %arg8: memref<1x128xf32, #tpu.memory_space<vmem>>, %arg9: memref<40x16xbf16, #tpu.memory_space<vmem>>, %arg10: memref<640x128xbf16, #tpu.memory_space<vmem>>, %arg11: memref<1x128xf32, #tpu.memory_space<vmem>>, %arg12: memref<1x128xf32, #tpu.memory_space<vmem>>, %arg13: memref<2x8xbf16, #tpu.memory_space<vmem>>, %arg14: memref<128x128xbf16, #tpu.memory_space<vmem>>, %arg15: memref<1x128xf32, #tpu.memory_space<vmem>>, %arg16: memref<2x128xf32, #tpu.memory_space<vmem>>) attributes {dimension_semantics = [], scalar_prefetch = 0 : i64, scratch_operands = 0 : i64, tpu.core_type = #tpu.core_type<tc>} {
    %c0 = arith.constant 0 : index
    %c0_0 = arith.constant 0 : index
    %0 = vector.load %arg0[%c0, %c0_0] : memref<64x128xf32, #tpu.memory_space<vmem>>, vector<64x128xf32>
    %1 = arith.truncf %0 : vector<64x128xf32> to vector<64x128xbf16>
    %c0_1 = arith.constant 0 : index
    %c0_2 = arith.constant 0 : index
    %2 = vector.load %arg1[%c0_1, %c0_2] : memref<160x64xbf16, #tpu.memory_space<vmem>>, vector<160x64xbf16>
    %cst = arith.constant dense<0.000000e+00> : vector<160x128xf32>
    %3 = tpu.matmul %2, %1, %cst {dimension_numbers = #tpu.dot_dimension_numbers<[1], [0], [0], [1], [0, 0, 1, 1], [], []>} : vector<160x64xbf16>, vector<64x128xbf16>, vector<160x128xf32> -> vector<160x128xf32>
    %4 = vector.extract_strided_slice %3 {offsets = [0, 0], sizes = [32, 128], strides = [1, 1]} : vector<160x128xf32> to vector<32x128xf32>
    %5 = vector.extract_strided_slice %3 {offsets = [32, 0], sizes = [32, 128], strides = [1, 1]} : vector<160x128xf32> to vector<32x128xf32>
    %6 = vector.extract_strided_slice %3 {offsets = [64, 0], sizes = [32, 128], strides = [1, 1]} : vector<160x128xf32> to vector<32x128xf32>
    %7 = vector.extract_strided_slice %3 {offsets = [96, 0], sizes = [32, 128], strides = [1, 1]} : vector<160x128xf32> to vector<32x128xf32>
    %8 = vector.extract_strided_slice %3 {offsets = [128, 0], sizes = [32, 128], strides = [1, 1]} : vector<160x128xf32> to vector<32x128xf32>
    %9 = tpu.concatenate %4, %5, %6, %7, %8 in 1 : vector<32x128xf32>, vector<32x128xf32>, vector<32x128xf32>, vector<32x128xf32>, vector<32x128xf32> -> vector<32x640xf32>
    %10 = arith.truncf %9 : vector<32x640xf32> to vector<32x640xbf16>
    %c0_3 = arith.constant 0 : index
    %c0_4 = arith.constant 0 : index
    %11 = vector.load %arg2[%c0_3, %c0_4] : memref<640x128xbf16, #tpu.memory_space<vmem>>, vector<640x128xbf16>
    %cst_5 = arith.constant dense<0.000000e+00> : vector<32x128xf32>
    %12 = tpu.matmul %10, %11, %cst_5 {dimension_numbers = #tpu.dot_dimension_numbers<[1], [0], [0], [1], [0, 0, 1, 1], [], []>} : vector<32x640xbf16>, vector<640x128xbf16>, vector<32x128xf32> -> vector<32x128xf32>
    %cst_6 = arith.constant dense<0.000000e+00> : vector<128xf32>
    %13 = vector.multi_reduction <add>, %12, %cst_6 [0] : vector<32x128xf32> to vector<128xf32>
    %14 = vector.shape_cast %13 : vector<128xf32> to vector<1x128xf32>
    %15 = arith.mulf %12, %12 : vector<32x128xf32>
    %cst_7 = arith.constant dense<0.000000e+00> : vector<128xf32>
    %16 = vector.multi_reduction <add>, %15, %cst_7 [0] : vector<32x128xf32> to vector<128xf32>
    %17 = vector.shape_cast %16 : vector<128xf32> to vector<1x128xf32>
    %c8_i32 = arith.constant 8 : i32
    %18 = tpu.dynamic_rotate %14 by %c8_i32 dim 1 : vector<1x128xf32>, i32 -> vector<1x128xf32>
    %19 = arith.addf %14, %18 : vector<1x128xf32>
    %c8_i32_8 = arith.constant 8 : i32
    %20 = tpu.dynamic_rotate %17 by %c8_i32_8 dim 1 : vector<1x128xf32>, i32 -> vector<1x128xf32>
    %21 = arith.addf %17, %20 : vector<1x128xf32>
    %c16_i32 = arith.constant 16 : i32
    %22 = tpu.dynamic_rotate %19 by %c16_i32 dim 1 : vector<1x128xf32>, i32 -> vector<1x128xf32>
    %23 = arith.addf %19, %22 : vector<1x128xf32>
    %c16_i32_9 = arith.constant 16 : i32
    %24 = tpu.dynamic_rotate %21 by %c16_i32_9 dim 1 : vector<1x128xf32>, i32 -> vector<1x128xf32>
    %25 = arith.addf %21, %24 : vector<1x128xf32>
    %c32_i32 = arith.constant 32 : i32
    %26 = tpu.dynamic_rotate %23 by %c32_i32 dim 1 : vector<1x128xf32>, i32 -> vector<1x128xf32>
    %27 = arith.addf %23, %26 : vector<1x128xf32>
    %c32_i32_10 = arith.constant 32 : i32
    %28 = tpu.dynamic_rotate %25 by %c32_i32_10 dim 1 : vector<1x128xf32>, i32 -> vector<1x128xf32>
    %29 = arith.addf %25, %28 : vector<1x128xf32>
    %c64_i32 = arith.constant 64 : i32
    %30 = tpu.dynamic_rotate %27 by %c64_i32 dim 1 : vector<1x128xf32>, i32 -> vector<1x128xf32>
    %31 = arith.addf %27, %30 : vector<1x128xf32>
    %c64_i32_11 = arith.constant 64 : i32
    %32 = tpu.dynamic_rotate %29 by %c64_i32_11 dim 1 : vector<1x128xf32>, i32 -> vector<1x128xf32>
    %33 = arith.addf %29, %32 : vector<1x128xf32>
    %cst_12 = arith.constant 0.001953125 : f32
    %34 = vector.broadcast %cst_12 : f32 to vector<1x128xf32>
    %35 = arith.mulf %31, %34 : vector<1x128xf32>
    %cst_13 = arith.constant 0.001953125 : f32
    %36 = vector.broadcast %cst_13 : f32 to vector<1x128xf32>
    %37 = arith.mulf %33, %36 : vector<1x128xf32>
    %38 = arith.mulf %35, %35 : vector<1x128xf32>
    %39 = arith.subf %37, %38 : vector<1x128xf32>
    %c0_14 = arith.constant 0 : index
    %c0_15 = arith.constant 0 : index
    %40 = vector.load %arg3[%c0_14, %c0_15] : memref<1x128xf32, #tpu.memory_space<vmem>>, vector<1x128xf32>
    %cst_16 = arith.constant 9.99999974E-6 : f32
    %41 = vector.broadcast %cst_16 : f32 to vector<1x128xf32>
    %42 = arith.addf %39, %41 : vector<1x128xf32>
    %43 = math.rsqrt %42 : vector<1x128xf32>
    %44 = arith.mulf %40, %43 : vector<1x128xf32>
    %c0_17 = arith.constant 0 : index
    %c0_18 = arith.constant 0 : index
    %45 = vector.load %arg4[%c0_17, %c0_18] : memref<1x128xf32, #tpu.memory_space<vmem>>, vector<1x128xf32>
    %46 = arith.mulf %35, %44 : vector<1x128xf32>
    %47 = arith.subf %45, %46 : vector<1x128xf32>
    %48 = vector.broadcast %44 : vector<1x128xf32> to vector<32x128xf32>
    %49 = arith.mulf %12, %48 : vector<32x128xf32>
    %50 = vector.broadcast %47 : vector<1x128xf32> to vector<32x128xf32>
    %51 = arith.addf %49, %50 : vector<32x128xf32>
    %cst_19 = arith.constant 0.000000e+00 : f32
    %52 = vector.broadcast %cst_19 : f32 to vector<32x128xf32>
    %53 = arith.maximumf %51, %52 : vector<32x128xf32>
    %54 = arith.truncf %53 : vector<32x128xf32> to vector<32x128xbf16>
    %c0_20 = arith.constant 0 : index
    %c0_21 = arith.constant 0 : index
    %55 = vector.load %arg5[%c0_20, %c0_21] : memref<80x32xbf16, #tpu.memory_space<vmem>>, vector<80x32xbf16>
    %cst_22 = arith.constant dense<0.000000e+00> : vector<80x128xf32>
    %56 = tpu.matmul %55, %54, %cst_22 {dimension_numbers = #tpu.dot_dimension_numbers<[1], [0], [0], [1], [0, 0, 1, 1], [], []>} : vector<80x32xbf16>, vector<32x128xbf16>, vector<80x128xf32> -> vector<80x128xf32>
    %57 = vector.extract_strided_slice %56 {offsets = [0, 0], sizes = [16, 128], strides = [1, 1]} : vector<80x128xf32> to vector<16x128xf32>
    %58 = vector.extract_strided_slice %56 {offsets = [16, 0], sizes = [16, 128], strides = [1, 1]} : vector<80x128xf32> to vector<16x128xf32>
    %59 = vector.extract_strided_slice %56 {offsets = [32, 0], sizes = [16, 128], strides = [1, 1]} : vector<80x128xf32> to vector<16x128xf32>
    %60 = vector.extract_strided_slice %56 {offsets = [48, 0], sizes = [16, 128], strides = [1, 1]} : vector<80x128xf32> to vector<16x128xf32>
    %61 = vector.extract_strided_slice %56 {offsets = [64, 0], sizes = [16, 128], strides = [1, 1]} : vector<80x128xf32> to vector<16x128xf32>
    %62 = tpu.concatenate %57, %58, %59, %60, %61 in 1 : vector<16x128xf32>, vector<16x128xf32>, vector<16x128xf32>, vector<16x128xf32>, vector<16x128xf32> -> vector<16x640xf32>
    %63 = arith.truncf %62 : vector<16x640xf32> to vector<16x640xbf16>
    %c0_23 = arith.constant 0 : index
    %c0_24 = arith.constant 0 : index
    %64 = vector.load %arg6[%c0_23, %c0_24] : memref<640x128xbf16, #tpu.memory_space<vmem>>, vector<640x128xbf16>
    %cst_25 = arith.constant dense<0.000000e+00> : vector<16x128xf32>
    %65 = tpu.matmul %63, %64, %cst_25 {dimension_numbers = #tpu.dot_dimension_numbers<[1], [0], [0], [1], [0, 0, 1, 1], [], []>} : vector<16x640xbf16>, vector<640x128xbf16>, vector<16x128xf32> -> vector<16x128xf32>
    %cst_26 = arith.constant dense<0.000000e+00> : vector<128xf32>
    %66 = vector.multi_reduction <add>, %65, %cst_26 [0] : vector<16x128xf32> to vector<128xf32>
    %67 = vector.shape_cast %66 : vector<128xf32> to vector<1x128xf32>
    %68 = arith.mulf %65, %65 : vector<16x128xf32>
    %cst_27 = arith.constant dense<0.000000e+00> : vector<128xf32>
    %69 = vector.multi_reduction <add>, %68, %cst_27 [0] : vector<16x128xf32> to vector<128xf32>
    %70 = vector.shape_cast %69 : vector<128xf32> to vector<1x128xf32>
    %c16_i32_28 = arith.constant 16 : i32
    %71 = tpu.dynamic_rotate %67 by %c16_i32_28 dim 1 : vector<1x128xf32>, i32 -> vector<1x128xf32>
    %72 = arith.addf %67, %71 : vector<1x128xf32>
    %c16_i32_29 = arith.constant 16 : i32
    %73 = tpu.dynamic_rotate %70 by %c16_i32_29 dim 1 : vector<1x128xf32>, i32 -> vector<1x128xf32>
    %74 = arith.addf %70, %73 : vector<1x128xf32>
    %c32_i32_30 = arith.constant 32 : i32
    %75 = tpu.dynamic_rotate %72 by %c32_i32_30 dim 1 : vector<1x128xf32>, i32 -> vector<1x128xf32>
    %76 = arith.addf %72, %75 : vector<1x128xf32>
    %c32_i32_31 = arith.constant 32 : i32
    %77 = tpu.dynamic_rotate %74 by %c32_i32_31 dim 1 : vector<1x128xf32>, i32 -> vector<1x128xf32>
    %78 = arith.addf %74, %77 : vector<1x128xf32>
    %c64_i32_32 = arith.constant 64 : i32
    %79 = tpu.dynamic_rotate %76 by %c64_i32_32 dim 1 : vector<1x128xf32>, i32 -> vector<1x128xf32>
    %80 = arith.addf %76, %79 : vector<1x128xf32>
    %c64_i32_33 = arith.constant 64 : i32
    %81 = tpu.dynamic_rotate %78 by %c64_i32_33 dim 1 : vector<1x128xf32>, i32 -> vector<1x128xf32>
    %82 = arith.addf %78, %81 : vector<1x128xf32>
    %cst_34 = arith.constant 7.812500e-03 : f32
    %83 = vector.broadcast %cst_34 : f32 to vector<1x128xf32>
    %84 = arith.mulf %80, %83 : vector<1x128xf32>
    %cst_35 = arith.constant 7.812500e-03 : f32
    %85 = vector.broadcast %cst_35 : f32 to vector<1x128xf32>
    %86 = arith.mulf %82, %85 : vector<1x128xf32>
    %87 = arith.mulf %84, %84 : vector<1x128xf32>
    %88 = arith.subf %86, %87 : vector<1x128xf32>
    %c0_36 = arith.constant 0 : index
    %c0_37 = arith.constant 0 : index
    %89 = vector.load %arg7[%c0_36, %c0_37] : memref<1x128xf32, #tpu.memory_space<vmem>>, vector<1x128xf32>
    %cst_38 = arith.constant 9.99999974E-6 : f32
    %90 = vector.broadcast %cst_38 : f32 to vector<1x128xf32>
    %91 = arith.addf %88, %90 : vector<1x128xf32>
    %92 = math.rsqrt %91 : vector<1x128xf32>
    %93 = arith.mulf %89, %92 : vector<1x128xf32>
    %c0_39 = arith.constant 0 : index
    %c0_40 = arith.constant 0 : index
    %94 = vector.load %arg8[%c0_39, %c0_40] : memref<1x128xf32, #tpu.memory_space<vmem>>, vector<1x128xf32>
    %95 = arith.mulf %84, %93 : vector<1x128xf32>
    %96 = arith.subf %94, %95 : vector<1x128xf32>
    %97 = vector.broadcast %93 : vector<1x128xf32> to vector<16x128xf32>
    %98 = arith.mulf %65, %97 : vector<16x128xf32>
    %99 = vector.broadcast %96 : vector<1x128xf32> to vector<16x128xf32>
    %100 = arith.addf %98, %99 : vector<16x128xf32>
    %cst_41 = arith.constant 0.000000e+00 : f32
    %101 = vector.broadcast %cst_41 : f32 to vector<16x128xf32>
    %102 = arith.maximumf %100, %101 : vector<16x128xf32>
    %103 = arith.truncf %102 : vector<16x128xf32> to vector<16x128xbf16>
    %c0_42 = arith.constant 0 : index
    %c0_43 = arith.constant 0 : index
    %104 = vector.load %arg9[%c0_42, %c0_43] : memref<40x16xbf16, #tpu.memory_space<vmem>>, vector<40x16xbf16>
    %cst_44 = arith.constant dense<0.000000e+00> : vector<40x128xf32>
    %105 = tpu.matmul %104, %103, %cst_44 {dimension_numbers = #tpu.dot_dimension_numbers<[1], [0], [0], [1], [0, 0, 1, 1], [], []>} : vector<40x16xbf16>, vector<16x128xbf16>, vector<40x128xf32> -> vector<40x128xf32>
    %106 = vector.extract_strided_slice %105 {offsets = [0, 0], sizes = [8, 128], strides = [1, 1]} : vector<40x128xf32> to vector<8x128xf32>
    %107 = vector.extract_strided_slice %105 {offsets = [8, 0], sizes = [8, 128], strides = [1, 1]} : vector<40x128xf32> to vector<8x128xf32>
    %108 = vector.extract_strided_slice %105 {offsets = [16, 0], sizes = [8, 128], strides = [1, 1]} : vector<40x128xf32> to vector<8x128xf32>
    %109 = vector.extract_strided_slice %105 {offsets = [24, 0], sizes = [8, 128], strides = [1, 1]} : vector<40x128xf32> to vector<8x128xf32>
    %110 = vector.extract_strided_slice %105 {offsets = [32, 0], sizes = [8, 128], strides = [1, 1]} : vector<40x128xf32> to vector<8x128xf32>
    %111 = tpu.concatenate %106, %107, %108, %109, %110 in 1 : vector<8x128xf32>, vector<8x128xf32>, vector<8x128xf32>, vector<8x128xf32>, vector<8x128xf32> -> vector<8x640xf32>
    %112 = arith.truncf %111 : vector<8x640xf32> to vector<8x640xbf16>
    %c0_45 = arith.constant 0 : index
    %c0_46 = arith.constant 0 : index
    %113 = vector.load %arg10[%c0_45, %c0_46] : memref<640x128xbf16, #tpu.memory_space<vmem>>, vector<640x128xbf16>
    %cst_47 = arith.constant dense<0.000000e+00> : vector<8x128xf32>
    %114 = tpu.matmul %112, %113, %cst_47 {dimension_numbers = #tpu.dot_dimension_numbers<[1], [0], [0], [1], [0, 0, 1, 1], [], []>} : vector<8x640xbf16>, vector<640x128xbf16>, vector<8x128xf32> -> vector<8x128xf32>
    %cst_48 = arith.constant dense<0.000000e+00> : vector<128xf32>
    %115 = vector.multi_reduction <add>, %114, %cst_48 [0] : vector<8x128xf32> to vector<128xf32>
    %116 = vector.shape_cast %115 : vector<128xf32> to vector<1x128xf32>
    %117 = arith.mulf %114, %114 : vector<8x128xf32>
    %cst_49 = arith.constant dense<0.000000e+00> : vector<128xf32>
    %118 = vector.multi_reduction <add>, %117, %cst_49 [0] : vector<8x128xf32> to vector<128xf32>
    %119 = vector.shape_cast %118 : vector<128xf32> to vector<1x128xf32>
    %c32_i32_50 = arith.constant 32 : i32
    %120 = tpu.dynamic_rotate %116 by %c32_i32_50 dim 1 : vector<1x128xf32>, i32 -> vector<1x128xf32>
    %121 = arith.addf %116, %120 : vector<1x128xf32>
    %c32_i32_51 = arith.constant 32 : i32
    %122 = tpu.dynamic_rotate %119 by %c32_i32_51 dim 1 : vector<1x128xf32>, i32 -> vector<1x128xf32>
    %123 = arith.addf %119, %122 : vector<1x128xf32>
    %c64_i32_52 = arith.constant 64 : i32
    %124 = tpu.dynamic_rotate %121 by %c64_i32_52 dim 1 : vector<1x128xf32>, i32 -> vector<1x128xf32>
    %125 = arith.addf %121, %124 : vector<1x128xf32>
    %c64_i32_53 = arith.constant 64 : i32
    %126 = tpu.dynamic_rotate %123 by %c64_i32_53 dim 1 : vector<1x128xf32>, i32 -> vector<1x128xf32>
    %127 = arith.addf %123, %126 : vector<1x128xf32>
    %cst_54 = arith.constant 3.125000e-02 : f32
    %128 = vector.broadcast %cst_54 : f32 to vector<1x128xf32>
    %129 = arith.mulf %125, %128 : vector<1x128xf32>
    %cst_55 = arith.constant 3.125000e-02 : f32
    %130 = vector.broadcast %cst_55 : f32 to vector<1x128xf32>
    %131 = arith.mulf %127, %130 : vector<1x128xf32>
    %132 = arith.mulf %129, %129 : vector<1x128xf32>
    %133 = arith.subf %131, %132 : vector<1x128xf32>
    %c0_56 = arith.constant 0 : index
    %c0_57 = arith.constant 0 : index
    %134 = vector.load %arg11[%c0_56, %c0_57] : memref<1x128xf32, #tpu.memory_space<vmem>>, vector<1x128xf32>
    %cst_58 = arith.constant 9.99999974E-6 : f32
    %135 = vector.broadcast %cst_58 : f32 to vector<1x128xf32>
    %136 = arith.addf %133, %135 : vector<1x128xf32>
    %137 = math.rsqrt %136 : vector<1x128xf32>
    %138 = arith.mulf %134, %137 : vector<1x128xf32>
    %c0_59 = arith.constant 0 : index
    %c0_60 = arith.constant 0 : index
    %139 = vector.load %arg12[%c0_59, %c0_60] : memref<1x128xf32, #tpu.memory_space<vmem>>, vector<1x128xf32>
    %140 = arith.mulf %129, %138 : vector<1x128xf32>
    %141 = arith.subf %139, %140 : vector<1x128xf32>
    %142 = vector.broadcast %138 : vector<1x128xf32> to vector<8x128xf32>
    %143 = arith.mulf %114, %142 : vector<8x128xf32>
    %144 = vector.broadcast %141 : vector<1x128xf32> to vector<8x128xf32>
    %145 = arith.addf %143, %144 : vector<8x128xf32>
    %cst_61 = arith.constant 0.000000e+00 : f32
    %146 = vector.broadcast %cst_61 : f32 to vector<8x128xf32>
    %147 = arith.maximumf %145, %146 : vector<8x128xf32>
    %148 = arith.truncf %147 : vector<8x128xf32> to vector<8x128xbf16>
    %c0_62 = arith.constant 0 : index
    %c0_63 = arith.constant 0 : index
    %149 = vector.load %arg13[%c0_62, %c0_63] : memref<2x8xbf16, #tpu.memory_space<vmem>>, vector<2x8xbf16>
    %cst_64 = arith.constant dense<0.000000e+00> : vector<2x128xf32>
    %150 = tpu.matmul %149, %148, %cst_64 {dimension_numbers = #tpu.dot_dimension_numbers<[1], [0], [0], [1], [0, 0, 1, 1], [], []>} : vector<2x8xbf16>, vector<8x128xbf16>, vector<2x128xf32> -> vector<2x128xf32>
    %151 = arith.truncf %150 : vector<2x128xf32> to vector<2x128xbf16>
    %c0_65 = arith.constant 0 : index
    %c0_66 = arith.constant 0 : index
    %152 = vector.load %arg14[%c0_65, %c0_66] : memref<128x128xbf16, #tpu.memory_space<vmem>>, vector<128x128xbf16>
    %cst_67 = arith.constant dense<0.000000e+00> : vector<2x128xf32>
    %153 = tpu.matmul %151, %152, %cst_67 {dimension_numbers = #tpu.dot_dimension_numbers<[1], [0], [0], [1], [0, 0, 1, 1], [], []>} : vector<2x128xbf16>, vector<128x128xbf16>, vector<2x128xf32> -> vector<2x128xf32>
    %c0_68 = arith.constant 0 : index
    %c0_69 = arith.constant 0 : index
    %154 = vector.load %arg15[%c0_68, %c0_69] : memref<1x128xf32, #tpu.memory_space<vmem>>, vector<1x128xf32>
    %155 = vector.broadcast %154 : vector<1x128xf32> to vector<2x128xf32>
    %156 = arith.addf %153, %155 : vector<2x128xf32>
    %157 = math.tanh %156 : vector<2x128xf32>
    %c0_70 = arith.constant 0 : index
    %c0_71 = arith.constant 0 : index
    %158 = vector.load %arg16[%c0_70, %c0_71] : memref<2x128xf32, #tpu.memory_space<vmem>>, vector<2x128xf32>
    tpu.vector_store %arg16[%c0_70, %c0_71], %157 {strides = array<i32>} : memref<2x128xf32, #tpu.memory_space<vmem>>, vector<2x128xf32>,
    return
  }
}

</mosaic_0001>

<llo_original>
// kernel: latent_state_encoder_forward.1
$region0: #{latent_state_encoder_forward.1}
  #allocation0 [shape = 'u32[]', space=smem, size = 0x4, offset = 0x4, fixed_abs, tag = 'smem constant byte address 0x4 - core index']
  #allocation1 [shape = 'u32[144,128]{1,0:T(1,128)}', space=vmem, size = 0x12000, scoped, tag = 'internal scratch']
  %s0 = inlined_call_operand.vmem [shape: f32[64,128], index: 0, kind: input, shape index: {}]
  %s1 = inlined_call_operand.vmem [shape: bf16[160,64], index: 1, kind: input, shape index: {}]
  %s2 = inlined_call_operand.vmem [shape: bf16[640,128], index: 2, kind: input, shape index: {}]
  %s3 = inlined_call_operand.vmem [shape: f32[1,128], index: 3, kind: input, shape index: {}]
  %s4 = inlined_call_operand.vmem [shape: f32[1,128], index: 4, kind: input, shape index: {}]
  %s5 = inlined_call_operand.vmem [shape: bf16[80,32], index: 5, kind: input, shape index: {}]
  %s6 = inlined_call_operand.vmem [shape: bf16[640,128], index: 6, kind: input, shape index: {}]
  %s7 = inlined_call_operand.vmem [shape: f32[1,128], index: 7, kind: input, shape index: {}]
  %s8 = inlined_call_operand.vmem [shape: f32[1,128], index: 8, kind: input, shape index: {}]
  %s9 = inlined_call_operand.vmem [shape: bf16[40,16], index: 9, kind: input, shape index: {}]
  %s10 = inlined_call_operand.vmem [shape: bf16[640,128], index: 10, kind: input, shape index: {}]
  %s11 = inlined_call_operand.vmem [shape: f32[1,128], index: 11, kind: input, shape index: {}]
  %s12 = inlined_call_operand.vmem [shape: f32[1,128], index: 12, kind: input, shape index: {}]
  %s13 = inlined_call_operand.vmem [shape: bf16[2,8], index: 13, kind: input, shape index: {}]
  %s14 = inlined_call_operand.vmem [shape: bf16[128,128], index: 14, kind: input, shape index: {}]
  %s15 = inlined_call_operand.vmem [shape: f32[1,128], index: 15, kind: input, shape index: {}]
  %s16 = inlined_call_operand.hbm [shape: f32[2,128], index: 16, kind: output, shape index: {}]
  %s17 = sld [smem:[#allocation0]]
  $region74: #{latent_state_encoder_forward.1} parent=0
    _
  %s19 = ssub.s32 1, %s17
  %s20 = scalar_select 0, %s19, %s17
  $region1: #{latent_state_encoder_forward.1} parent=0
    #allocation2 [shape = 'u8[1024]{0}', space=vmem, size = 0x400, scoped, tag = 'output window, operand 0, single buffered']
    #allocation3 [shape = 's32[1]{0}', space=sflag, size = 0x4, scoped, tag = 'scoped memory for latent_state_encoder_forward.1']
    %21 = vsyncpa [#allocation3], 0
    // Predicated region
    $region2: #{latent_state_encoder_forward.1} parent=1 // pred_check
      _
    $region3: #{latent_state_encoder_forward.1} parent=1 // pred_check_branch
      %23 = sbr.rel (0) target = $region5
    $region4: #{latent_state_encoder_forward.1} parent=1 // pred_region
      _
    $region5: #{latent_state_encoder_forward.1} parent=1 // pred_fallthru
      _
    // Predicated region
    $region6: #{latent_state_encoder_forward.1} parent=1 // pred_check
      _
    $region7: #{latent_state_encoder_forward.1} parent=1 // pred_check_branch
      %25 = sbr.rel (0) target = $region9
    $region8: #{latent_state_encoder_forward.1} parent=1 // pred_region
      _
    $region9: #{latent_state_encoder_forward.1} parent=1 // pred_fallthru
      _
    // Predicated region
    $region10: #{latent_state_encoder_forward.1} parent=1 // pred_check
      _
    $region11: #{latent_state_encoder_forward.1} parent=1 // pred_check_branch
      %27 = sbr.rel (0) target = $region13
    $region12: #{latent_state_encoder_forward.1} parent=1 // pred_region
      _
    $region13: #{latent_state_encoder_forward.1} parent=1 // pred_fallthru
      _
    // Predicated region
    $region14: #{latent_state_encoder_forward.1} parent=1 // pred_check
      _
    $region15: #{latent_state_encoder_forward.1} parent=1 // pred_check_branch
      %29 = sbr.rel (0) target = $region17
    $region16: #{latent_state_encoder_forward.1} parent=1 // pred_region
      _
    $region17: #{latent_state_encoder_forward.1} parent=1 // pred_fallthru
      _
    // Predicated region
    $region18: #{latent_state_encoder_forward.1} parent=1 // pred_check
      _
    $region19: #{latent_state_encoder_forward.1} parent=1 // pred_check_branch
      %31 = sbr.rel (0) target = $region21
    $region20: #{latent_state_encoder_forward.1} parent=1 // pred_region
      _
    $region21: #{latent_state_encoder_forward.1} parent=1 // pred_fallthru
      _
    // Predicated region
    $region22: #{latent_state_encoder_forward.1} parent=1 // pred_check
      _
    $region23: #{latent_state_encoder_forward.1} parent=1 // pred_check_branch
      %33 = sbr.rel (0) target = $region25
    $region24: #{latent_state_encoder_forward.1} parent=1 // pred_region
      _
    $region25: #{latent_state_encoder_forward.1} parent=1 // pred_fallthru
      _
    // Predicated region
    $region26: #{latent_state_encoder_forward.1} parent=1 // pred_check
      _
    $region27: #{latent_state_encoder_forward.1} parent=1 // pred_check_branch
      %35 = sbr.rel (0) target = $region29
    $region28: #{latent_state_encoder_forward.1} parent=1 // pred_region
      _
    $region29: #{latent_state_encoder_forward.1} parent=1 // pred_fallthru
      _
    // Predicated region
    $region30: #{latent_state_encoder_forward.1} parent=1 // pred_check
      _
    $region31: #{latent_state_encoder_forward.1} parent=1 // pred_check_branch
      %37 = sbr.rel (0) target = $region33
    $region32: #{latent_state_encoder_forward.1} parent=1 // pred_region
      _
    $region33: #{latent_state_encoder_forward.1} parent=1 // pred_fallthru
      _
    // Predicated region
    $region34: #{latent_state_encoder_forward.1} parent=1 // pred_check
      _
    $region35: #{latent_state_encoder_forward.1} parent=1 // pred_check_branch
      %39 = sbr.rel (0) target = $region37
    $region36: #{latent_state_encoder_forward.1} parent=1 // pred_region
      _
    $region37: #{latent_state_encoder_forward.1} parent=1 // pred_fallthru
      _
    // Predicated region
    $region38: #{latent_state_encoder_forward.1} parent=1 // pred_check
      _
    $region39: #{latent_state_encoder_forward.1} parent=1 // pred_check_branch
      %41 = sbr.rel (0) target = $region41
    $region40: #{latent_state_encoder_forward.1} parent=1 // pred_region
      _
    $region41: #{latent_state_encoder_forward.1} parent=1 // pred_fallthru
      _
    // Predicated region
    $region42: #{latent_state_encoder_forward.1} parent=1 // pred_check
      _
    $region43: #{latent_state_encoder_forward.1} parent=1 // pred_check_branch
      %43 = sbr.rel (0) target = $region45
    $region44: #{latent_state_encoder_forward.1} parent=1 // pred_region
      _
    $region45: #{latent_state_encoder_forward.1} parent=1 // pred_fallthru
      _
    // Predicated region
    $region46: #{latent_state_encoder_forward.1} parent=1 // pred_check
      _
    $region47: #{latent_state_encoder_forward.1} parent=1 // pred_check_branch
      %45 = sbr.rel (0) target = $region49
    $region48: #{latent_state_encoder_forward.1} parent=1 // pred_region
      _
    $region49: #{latent_state_encoder_forward.1} parent=1 // pred_fallthru
      _
    // Predicated region
    $region50: #{latent_state_encoder_forward.1} parent=1 // pred_check
      _
    $region51: #{latent_state_encoder_forward.1} parent=1 // pred_check_branch
      %47 = sbr.rel (0) target = $region53
    $region52: #{latent_state_encoder_forward.1} parent=1 // pred_region
      _
    $region53: #{latent_state_encoder_forward.1} parent=1 // pred_fallthru
      _
    // Predicated region
    $region54: #{latent_state_encoder_forward.1} parent=1 // pred_check
      _
    $region55: #{latent_state_encoder_forward.1} parent=1 // pred_check_branch
      %49 = sbr.rel (0) target = $region57
    $region56: #{latent_state_encoder_forward.1} parent=1 // pred_region
      _
    $region57: #{latent_state_encoder_forward.1} parent=1 // pred_fallthru
      _
    // Predicated region
    $region58: #{latent_state_encoder_forward.1} parent=1 // pred_check
      _
    $region59: #{latent_state_encoder_forward.1} parent=1 // pred_check_branch
      %51 = sbr.rel (0) target = $region61
    $region60: #{latent_state_encoder_forward.1} parent=1 // pred_region
      _
    $region61: #{latent_state_encoder_forward.1} parent=1 // pred_fallthru
      _
    // Predicated region
    $region62: #{latent_state_encoder_forward.1} parent=1 // pred_check
      _
    $region63: #{latent_state_encoder_forward.1} parent=1 // pred_check_branch
      %53 = sbr.rel (0) target = $region65
    $region64: #{latent_state_encoder_forward.1} parent=1 // pred_region
      _
    $region65: #{latent_state_encoder_forward.1} parent=1 // pred_fallthru
      _
    %v55 = vld [vmem:[%s0] sm:$0xff]
    %v56 = vld [vmem:[%s0 + $0x8] sm:$0xff]
    %v57 = vld [vmem:[%s0 + $0x10] sm:$0xff]
    %v58 = vld [vmem:[%s0 + $0x18] sm:$0xff]
    %v59 = vld [vmem:[%s0 + $0x20] sm:$0xff]
    %v60 = vld [vmem:[%s0 + $0x28] sm:$0xff]
    %v61 = vld [vmem:[%s0 + $0x30] sm:$0xff]
    %v62 = vld [vmem:[%s0 + $0x38] sm:$0xff]
    %v63 = vpack.c.bf16 %v56, %v55
    %v64 = vpack.c.bf16 %v58, %v57
    %v65 = vpack.c.bf16 %v60, %v59
    %v66 = vpack.c.bf16 %v62, %v61
    %v67 = vld [vmem:[%s1] sm:$0xf]
    %v68 = vld [vmem:[%s1 + $0x4] sm:$0xf]
    %v69 = vld [vmem:[%s1 + $0x8] sm:$0xf]
    %v70 = vld [vmem:[%s1 + $0xc] sm:$0xf]
    %v71 = vld [vmem:[%s1 + $0x10] sm:$0xf]
    %v72 = vld [vmem:[%s1 + $0x14] sm:$0xf]
    %v73 = vld [vmem:[%s1 + $0x18] sm:$0xf]
    %v74 = vld [vmem:[%s1 + $0x1c] sm:$0xf]
    %v75 = vld [vmem:[%s1 + $0x20] sm:$0xf]
    %v76 = vld [vmem:[%s1 + $0x24] sm:$0xf]
    %v77 = vld [vmem:[%s1 + $0x28] sm:$0xf]
    %v78 = vld [vmem:[%s1 + $0x2c] sm:$0xf]
    %v79 = vld [vmem:[%s1 + $0x30] sm:$0xf]
    %v80 = vld [vmem:[%s1 + $0x34] sm:$0xf]
    %v81 = vld [vmem:[%s1 + $0x38] sm:$0xf]
    %v82 = vld [vmem:[%s1 + $0x3c] sm:$0xf]
    %v83 = vld [vmem:[%s1 + $0x40] sm:$0xf]
    %v84 = vld [vmem:[%s1 + $0x44] sm:$0xf]
    %v85 = vld [vmem:[%s1 + $0x48] sm:$0xf]
    %v86 = vld [vmem:[%s1 + $0x4c] sm:$0xf]
    %v107 = vunpack.c.l.b16 %v67
    %v108 = vunpack.c.l.b16 %v68
    %v109 = vunpack.c.l.b16 %v69
    %v110 = vunpack.c.l.b16 %v70
    %v111 = vunpack.c.l.b16 %v71
    %v112 = vunpack.c.l.b16 %v72
    %v113 = vunpack.c.l.b16 %v73
    %v114 = vunpack.c.l.b16 %v74
    %v115 = vunpack.c.l.b16 %v75
    %v116 = vunpack.c.l.b16 %v76
    %v117 = vunpack.c.l.b16 %v77
    %v118 = vunpack.c.l.b16 %v78
    %v119 = vunpack.c.l.b16 %v79
    %v120 = vunpack.c.l.b16 %v80
    %v121 = vunpack.c.l.b16 %v81
    %v122 = vunpack.c.l.b16 %v82
    %v123 = vunpack.c.l.b16 %v83
    %v124 = vunpack.c.l.b16 %v84
    %v125 = vunpack.c.l.b16 %v85
    %v126 = vunpack.c.l.b16 %v86
    %v127 = vpack.c.b16 %v108, %v107
    %v128 = vpack.c.b16 %v110, %v109
    %v129 = vpack.c.b16 %v112, %v111
    %v130 = vpack.c.b16 %v114, %v113
    %v131 = vpack.c.b16 %v116, %v115
    %v132 = vpack.c.b16 %v118, %v117
    %v133 = vpack.c.b16 %v120, %v119
    %v134 = vpack.c.b16 %v122, %v121
    %v135 = vpack.c.b16 %v124, %v123
    %v136 = vpack.c.b16 %v126, %v125
    %vm137 = vcmask 523264
    %v139 = vsel %vm137, %v127, 0
    %v142 = vsel %vm137, %v128, 0
    %v145 = vsel %vm137, %v129, 0
    %v148 = vsel %vm137, %v130, 0
    %v151 = vsel %vm137, %v131, 0
    %v154 = vsel %vm137, %v132, 0
    %v157 = vsel %vm137, %v133, 0
    %v160 = vsel %vm137, %v134, 0
    %v163 = vsel %vm137, %v135, 0
    %v166 = vsel %vm137, %v136, 0
    %168 = vmatprep.subr.bf16.mxu0 0
    %169 = vmatpush1.bf16.msra.mxu0 %v63
    %170 = vmatprep.subr.bf16.mxu0 0
    %171 = vmatpush1.bf16.msra.mxu0 %v64
    %172 = vmatprep.subr.bf16.mxu0 0
    %173 = vmatpush1.bf16.msra.mxu0 %v65
    %174 = vmatprep.subr.bf16.mxu0 0
    %175 = vmatpush1.bf16.msra.mxu0 %v66
    %176 = vmatprep.subr.bf16.mxu0 0
    %177 = vmatpush1.bf16.msra.mxu0 0
    %178 = vmatprep.subr.bf16.mxu0 0
    %179 = vmatpush1.bf16.msra.mxu0 0
    %180 = vmatprep.subr.bf16.mxu0 0
    %181 = vmatpush1.bf16.msra.mxu0 0
    %182 = vmatprep.subr.bf16.mxu0 0
    %183 = vmatpush1.bf16.msra.mxu0 0
    %184 = vmatprep.subr.bf16.mxu0 0
    %185 = vmatpush1.bf16.msra.mxu0 0
    %186 = vmatprep.subr.bf16.mxu0 0
    %187 = vmatpush1.bf16.msra.mxu0 0
    %188 = vmatprep.subr.bf16.mxu0 0
    %189 = vmatpush1.bf16.msra.mxu0 0
    %190 = vmatprep.subr.bf16.mxu0 0
    %191 = vmatpush1.bf16.msra.mxu0 0
    %192 = vmatprep.subr.bf16.mxu0 0
    %193 = vmatpush1.bf16.msra.mxu0 0
    %194 = vmatprep.subr.bf16.mxu0 0
    %195 = vmatpush1.bf16.msra.mxu0 0
    %196 = vmatprep.subr.bf16.mxu0 0
    %197 = vmatpush1.bf16.msra.mxu0 0
    %198 = vmatprep.subr.bf16.mxu0 0
    %199 = vmatpush1.bf16.msra.mxu0 0
    %200 = vmatprep.mubr.bf16.mxu0 0
    %201 = vmatmul.mubr.bf16.gmra.mrb[0].mxu0 %v139
    %v202 = vpop.f32.mrb[0].mxu0
    %v203 = vadd.f32 0.0, %v202
    %v204 = vpop.f32.mrb[0].mxu0
    %v205 = vpop.f32.mrb[0].mxu0
    %v206 = vadd.f32 0.0, %v205
    %v207 = vpop.f32.mrb[0].mxu0
    %208 = vmatprep.mubr.bf16.mxu0 0
    %209 = vmatmul.mubr.bf16.gmra.mrb[0].mxu0 %v142
    %v210 = vpop.f32.mrb[0].mxu0
    %v211 = vadd.f32 0.0, %v210
    %v212 = vpop.f32.mrb[0].mxu0
    %v213 = vpop.f32.mrb[0].mxu0
    %v214 = vadd.f32 0.0, %v213
    %v215 = vpop.f32.mrb[0].mxu0
    %216 = vmatprep.mubr.bf16.mxu0 0
    %217 = vmatmul.mubr.bf16.gmra.mrb[0].mxu0 %v145
    %v218 = vpop.f32.mrb[0].mxu0
    %v219 = vadd.f32 0.0, %v218
    %v220 = vpop.f32.mrb[0].mxu0
    %v221 = vpop.f32.mrb[0].mxu0
    %v222 = vadd.f32 0.0, %v221
    %v223 = vpop.f32.mrb[0].mxu0
    %224 = vmatprep.mubr.bf16.mxu0 0
    %225 = vmatmul.mubr.bf16.gmra.mrb[0].mxu0 %v148
    %v226 = vpop.f32.mrb[0].mxu0
    %v227 = vadd.f32 0.0, %v226
    %v228 = vpop.f32.mrb[0].mxu0
    %v229 = vpop.f32.mrb[0].mxu0
    %v230 = vadd.f32 0.0, %v229
    %v231 = vpop.f32.mrb[0].mxu0
    %232 = vmatprep.mubr.bf16.mxu0 0
    %233 = vmatmul.mubr.bf16.gmra.mrb[0].mxu0 %v151
    %v234 = vpop.f32.mrb[0].mxu0
    %v235 = vadd.f32 0.0, %v234
    %v236 = vpop.f32.mrb[0].mxu0
    %v237 = vpop.f32.mrb[0].mxu0
    %v238 = vadd.f32 0.0, %v237
    %v239 = vpop.f32.mrb[0].mxu0
    %240 = vmatprep.mubr.bf16.mxu0 0
    %241 = vmatmul.mubr.bf16.gmra.mrb[0].mxu0 %v154
    %v242 = vpop.f32.mrb[0].mxu0
    %v243 = vadd.f32 0.0, %v242
    %v244 = vpop.f32.mrb[0].mxu0
    %v245 = vpop.f32.mrb[0].mxu0
    %v246 = vadd.f32 0.0, %v245
    %v247 = vpop.f32.mrb[0].mxu0
    %248 = vmatprep.mubr.bf16.mxu0 0
    %249 = vmatmul.mubr.bf16.gmra.mrb[0].mxu0 %v157
    %v250 = vpop.f32.mrb[0].mxu0
    %v251 = vadd.f32 0.0, %v250
    %v252 = vpop.f32.mrb[0].mxu0
    %v253 = vpop.f32.mrb[0].mxu0
    %v254 = vadd.f32 0.0, %v253
    %v255 = vpop.f32.mrb[0].mxu0
    %256 = vmatprep.mubr.bf16.mxu0 0
    %257 = vmatmul.mubr.bf16.gmra.mrb[0].mxu0 %v160
    %v258 = vpop.f32.mrb[0].mxu0
    %v259 = vadd.f32 0.0, %v258
    %v260 = vpop.f32.mrb[0].mxu0
    %v261 = vpop.f32.mrb[0].mxu0
    %v262 = vadd.f32 0.0, %v261
    %v263 = vpop.f32.mrb[0].mxu0
    %264 = vmatprep.mubr.bf16.mxu0 0
    %265 = vmatmul.mubr.bf16.gmra.mrb[0].mxu0 %v163
    %v266 = vpop.f32.mrb[0].mxu0
    %v267 = vadd.f32 0.0, %v266
    %v268 = vpop.f32.mrb[0].mxu0
    %v269 = vpop.f32.mrb[0].mxu0
    %v270 = vadd.f32 0.0, %v269
    %v271 = vpop.f32.mrb[0].mxu0
    %272 = vmatprep.mubr.bf16.mxu0 0
    %273 = vmatmul.mubr.bf16.gmra.mrb[0].mxu0 %v166
    %v274 = vpop.f32.mrb[0].mxu0
    %v275 = vadd.f32 0.0, %v274
    %v276 = vpop.f32.mrb[0].mxu0
    %v277 = vpop.f32.mrb[0].mxu0
    %v278 = vadd.f32 0.0, %v277
    %v279 = vpop.f32.mrb[0].mxu0
    %280 = vdwg.mxu0
    %v281 = vpack.c.bf16 %v206, %v203
    %v282 = vpack.c.bf16 %v222, %v219
    %v283 = vpack.c.bf16 %v238, %v235
    %v284 = vpack.c.bf16 %v254, %v251
    %v285 = vpack.c.bf16 %v270, %v267
    %v286 = vpack.c.bf16 %v214, %v211
    %v287 = vpack.c.bf16 %v230, %v227
    %v288 = vpack.c.bf16 %v246, %v243
    %v289 = vpack.c.bf16 %v262, %v259
    %v290 = vpack.c.bf16 %v278, %v275
    %v291 = vld [vmem:[%s2] sm:$0xf]
    %v292 = vld [vmem:[%s2 + $0x4] sm:$0xf]
    %v293 = vld [vmem:[%s2 + $0x8] sm:$0xf]
    %v294 = vld [vmem:[%s2 + $0xc] sm:$0xf]
    %v295 = vld [vmem:[%s2 + $0x10] sm:$0xf]
    %v296 = vld [vmem:[%s2 + $0x14] sm:$0xf]
    %v297 = vld [vmem:[%s2 + $0x18] sm:$0xf]
    %v298 = vld [vmem:[%s2 + $0x1c] sm:$0xf]
    %v299 = vld [vmem:[%s2 + $0x20] sm:$0xf]
    %v300 = vld [vmem:[%s2 + $0x24] sm:$0xf]
    %v301 = vld [vmem:[%s2 + $0x28] sm:$0xf]
    %v302 = vld [vmem:[%s2 + $0x2c] sm:$0xf]
    %v303 = vld [vmem:[%s2 + $0x30] sm:$0xf]
    %v304 = vld [vmem:[%s2 + $0x34] sm:$0xf]
    %v305 = vld [vmem:[%s2 + $0x38] sm:$0xf]
    %v306 = vld [vmem:[%s2 + $0x3c] sm:$0xf]
    %v307 = vld [vmem:[%s2 + $0x40] sm:$0xf]
    %v308 = vld [vmem:[%s2 + $0x44] sm:$0xf]
    %v309 = vld [vmem:[%s2 + $0x48] sm:$0xf]
    %v310 = vld [vmem:[%s2 + $0x4c] sm:$0xf]
    %v311 = vld [vmem:[%s2 + $0x50] sm:$0xf]
    %v312 = vld [vmem:[%s2 + $0x54] sm:$0xf]
    %v313 = vld [vmem:[%s2 + $0x58] sm:$0xf]
    %v314 = vld [vmem:[%s2 + $0x5c] sm:$0xf]
    %v315 = vld [vmem:[%s2 + $0x60] sm:$0xf]
    %v316 = vld [vmem:[%s2 + $0x64] sm:$0xf]
    %v317 = vld [vmem:[%s2 + $0x68] sm:$0xf]
    %v318 = vld [vmem:[%s2 + $0x6c] sm:$0xf]
    %v319 = vld [vmem:[%s2 + $0x70] sm:$0xf]
    %v320 = vld [vmem:[%s2 + $0x74] sm:$0xf]
    %v321 = vld [vmem:[%s2 + $0x78] sm:$0xf]
    %v322 = vld [vmem:[%s2 + $0x7c] sm:$0xf]
    %v323 = vld [vmem:[%s2 + $0x80] sm:$0xf]
    %v324 = vld [vmem:[%s2 + $0x84] sm:$0xf]
    %v325 = vld [vmem:[%s2 + $0x88] sm:$0xf]
    %v326 = vld [vmem:[%s2 + $0x8c] sm:$0xf]
    %v327 = vld [vmem:[%s2 + $0x90] sm:$0xf]
    %v328 = vld [vmem:[%s2 + $0x94] sm:$0xf]
    %v329 = vld [vmem:[%s2 + $0x98] sm:$0xf]
    %v330 = vld [vmem:[%s2 + $0x9c] sm:$0xf]
    %v331 = vld [vmem:[%s2 + $0xa0] sm:$0xf]
    %v332 = vld [vmem:[%s2 + $0xa4] sm:$0xf]
    %v333 = vld [vmem:[%s2 + $0xa8] sm:$0xf]
    %v334 = vld [vmem:[%s2 + $0xac] sm:$0xf]
    %v335 = vld [vmem:[%s2 + $0xb0] sm:$0xf]
    %v336 = vld [vmem:[%s2 + $0xb4] sm:$0xf]
    %v337 = vld [vmem:[%s2 + $0xb8] sm:$0xf]
    %v338 = vld [vmem:[%s2 + $0xbc] sm:$0xf]
    %v339 = vld [vmem:[%s2 + $0xc0] sm:$0xf]
    %v340 = vld [vmem:[%s2 + $0xc4] sm:$0xf]
    %v341 = vld [vmem:[%s2 + $0xc8] sm:$0xf]
    %v342 = vld [vmem:[%s2 + $0xcc] sm:$0xf]
    %v343 = vld [vmem:[%s2 + $0xd0] sm:$0xf]
    %v344 = vld [vmem:[%s2 + $0xd4] sm:$0xf]
    %v345 = vld [vmem:[%s2 + $0xd8] sm:$0xf]
    %v346 = vld [vmem:[%s2 + $0xdc] sm:$0xf]
    %v347 = vld [vmem:[%s2 + $0xe0] sm:$0xf]
    %v348 = vld [vmem:[%s2 + $0xe4] sm:$0xf]
    %v349 = vld [vmem:[%s2 + $0xe8] sm:$0xf]
    %v350 = vld [vmem:[%s2 + $0xec] sm:$0xf]
    %v351 = vld [vmem:[%s2 + $0xf0] sm:$0xf]
    %v352 = vld [vmem:[%s2 + $0xf4] sm:$0xf]
    %v353 = vld [vmem:[%s2 + $0xf8] sm:$0xf]
    %v354 = vld [vmem:[%s2 + $0xfc] sm:$0xf]
    %v355 = vld [vmem:[%s2 + $0x100] sm:$0xf]
    %v356 = vld [vmem:[%s2 + $0x104] sm:$0xf]
    %v357 = vld [vmem:[%s2 + $0x108] sm:$0xf]
    %v358 = vld [vmem:[%s2 + $0x10c] sm:$0xf]
    %v359 = vld [vmem:[%s2 + $0x110] sm:$0xf]
    %v360 = vld [vmem:[%s2 + $0x114] sm:$0xf]
    %v361 = vld [vmem:[%s2 + $0x118] sm:$0xf]
    %v362 = vld [vmem:[%s2 + $0x11c] sm:$0xf]
    %v363 = vld [vmem:[%s2 + $0x120] sm:$0xf]
    %v364 = vld [vmem:[%s2 + $0x124] sm:$0xf]
    %v365 = vld [vmem:[%s2 + $0x128] sm:$0xf]
    %v366 = vld [vmem:[%s2 + $0x12c] sm:$0xf]
    %v367 = vld [vmem:[%s2 + $0x130] sm:$0xf]
    %v368 = vld [vmem:[%s2 + $0x134] sm:$0xf]
    %v369 = vld [vmem:[%s2 + $0x138] sm:$0xf]
    %v370 = vld [vmem:[%s2 + $0x13c] sm:$0xf]
    %v451 = vunpack.c.l.b16 %v291
    %v452 = vunpack.c.l.b16 %v292
    %v453 = vunpack.c.l.b16 %v293
    %v454 = vunpack.c.l.b16 %v294
    %v455 = vunpack.c.l.b16 %v295
    %v456 = vunpack.c.l.b16 %v296
    %v457 = vunpack.c.l.b16 %v297
    %v458 = vunpack.c.l.b16 %v298
    %v459 = vunpack.c.l.b16 %v299
    %v460 = vunpack.c.l.b16 %v300
    %v461 = vunpack.c.l.b16 %v301
    %v462 = vunpack.c.l.b16 %v302
    %v463 = vunpack.c.l.b16 %v303
    %v464 = vunpack.c.l.b16 %v304
    %v465 = vunpack.c.l.b16 %v305
    %v466 = vunpack.c.l.b16 %v306
    %v467 = vunpack.c.l.b16 %v307
    %v468 = vunpack.c.l.b16 %v308
    %v469 = vunpack.c.l.b16 %v309
    %v470 = vunpack.c.l.b16 %v310
    %v471 = vunpack.c.l.b16 %v311
    %v472 = vunpack.c.l.b16 %v312
    %v473 = vunpack.c.l.b16 %v313
    %v474 = vunpack.c.l.b16 %v314
    %v475 = vunpack.c.l.b16 %v315
    %v476 = vunpack.c.l.b16 %v316
    %v477 = vunpack.c.l.b16 %v317
    %v478 = vunpack.c.l.b16 %v318
    %v479 = vunpack.c.l.b16 %v319
    %v480 = vunpack.c.l.b16 %v320
    %v481 = vunpack.c.l.b16 %v321
    %v482 = vunpack.c.l.b16 %v322
    %v483 = vunpack.c.l.b16 %v323
    %v484 = vunpack.c.l.b16 %v324
    %v485 = vunpack.c.l.b16 %v325
    %v486 = vunpack.c.l.b16 %v326
    %v487 = vunpack.c.l.b16 %v327
    %v488 = vunpack.c.l.b16 %v328
    %v489 = vunpack.c.l.b16 %v329
    %v490 = vunpack.c.l.b16 %v330
    %v491 = vunpack.c.l.b16 %v331
    %v492 = vunpack.c.l.b16 %v332
    %v493 = vunpack.c.l.b16 %v333
    %v494 = vunpack.c.l.b16 %v334
    %v495 = vunpack.c.l.b16 %v335
    %v496 = vunpack.c.l.b16 %v336
    %v497 = vunpack.c.l.b16 %v337
    %v498 = vunpack.c.l.b16 %v338
    %v499 = vunpack.c.l.b16 %v339
    %v500 = vunpack.c.l.b16 %v340
    %v501 = vunpack.c.l.b16 %v341
    %v502 = vunpack.c.l.b16 %v342
    %v503 = vunpack.c.l.b16 %v343
    %v504 = vunpack.c.l.b16 %v344
    %v505 = vunpack.c.l.b16 %v345
    %v506 = vunpack.c.l.b16 %v346
    %v507 = vunpack.c.l.b16 %v347
    %v508 = vunpack.c.l.b16 %v348
    %v509 = vunpack.c.l.b16 %v349
    %v510 = vunpack.c.l.b16 %v350
    %v511 = vunpack.c.l.b16 %v351
    %v512 = vunpack.c.l.b16 %v352
    %v513 = vunpack.c.l.b16 %v353
    %v514 = vunpack.c.l.b16 %v354
    %v515 = vunpack.c.l.b16 %v355
    %v516 = vunpack.c.l.b16 %v356
    %v517 = vunpack.c.l.b16 %v357
    %v518 = vunpack.c.l.b16 %v358
    %v519 = vunpack.c.l.b16 %v359
    %v520 = vunpack.c.l.b16 %v360
    %v521 = vunpack.c.l.b16 %v361
    %v522 = vunpack.c.l.b16 %v362
    %v523 = vunpack.c.l.b16 %v363
    %v524 = vunpack.c.l.b16 %v364
    %v525 = vunpack.c.l.b16 %v365
    %v526 = vunpack.c.l.b16 %v366
    %v527 = vunpack.c.l.b16 %v367
    %v528 = vunpack.c.l.b16 %v368
    %v529 = vunpack.c.l.b16 %v369
    %v530 = vunpack.c.l.b16 %v370
    %v531 = vpack.c.b16 %v452, %v451
    %v532 = vpack.c.b16 %v454, %v453
    %v533 = vpack.c.b16 %v456, %v455
    %v534 = vpack.c.b16 %v458, %v457
    %v535 = vpack.c.b16 %v460, %v459
    %v536 = vpack.c.b16 %v462, %v461
    %v537 = vpack.c.b16 %v464, %v463
    %v538 = vpack.c.b16 %v466, %v465
    %v539 = vpack.c.b16 %v468, %v467
    %v540 = vpack.c.b16 %v470, %v469
    %v541 = vpack.c.b16 %v472, %v471
    %v542 = vpack.c.b16 %v474, %v473
    %v543 = vpack.c.b16 %v476, %v475
    %v544 = vpack.c.b16 %v478, %v477
    %v545 = vpack.c.b16 %v480, %v479
    %v546 = vpack.c.b16 %v482, %v481
    %v547 = vpack.c.b16 %v484, %v483
    %v548 = vpack.c.b16 %v486, %v485
    %v549 = vpack.c.b16 %v488, %v487
    %v550 = vpack.c.b16 %v490, %v489
    %v551 = vpack.c.b16 %v492, %v491
    %v552 = vpack.c.b16 %v494, %v493
    %v553 = vpack.c.b16 %v496, %v495
    %v554 = vpack.c.b16 %v498, %v497
    %v555 = vpack.c.b16 %v500, %v499
    %v556 = vpack.c.b16 %v502, %v501
    %v557 = vpack.c.b16 %v504, %v503
    %v558 = vpack.c.b16 %v506, %v505
    %v559 = vpack.c.b16 %v508, %v507
    %v560 = vpack.c.b16 %v510, %v509
    %v561 = vpack.c.b16 %v512, %v511
    %v562 = vpack.c.b16 %v514, %v513
    %v563 = vpack.c.b16 %v516, %v515
    %v564 = vpack.c.b16 %v518, %v517
    %v565 = vpack.c.b16 %v520, %v519
    %v566 = vpack.c.b16 %v522, %v521
    %v567 = vpack.c.b16 %v524, %v523
    %v568 = vpack.c.b16 %v526, %v525
    %v569 = vpack.c.b16 %v528, %v527
    %v570 = vpack.c.b16 %v530, %v529
    %611 = vmatprep.subr.bf16.mxu0 0
    %612 = vmatpush1.bf16.msra.mxu0 %v531
    %613 = vmatprep.subr.bf16.mxu0 0
    %614 = vmatpush1.bf16.msra.mxu0 %v532
    %615 = vmatprep.subr.bf16.mxu0 0
    %616 = vmatpush1.bf16.msra.mxu0 %v533
    %617 = vmatprep.subr.bf16.mxu0 0
    %618 = vmatpush1.bf16.msra.mxu0 %v534
    %619 = vmatprep.subr.bf16.mxu0 0
    %620 = vmatpush1.bf16.msra.mxu0 %v535
    %621 = vmatprep.subr.bf16.mxu0 0
    %622 = vmatpush1.bf16.msra.mxu0 %v536
    %623 = vmatprep.subr.bf16.mxu0 0
    %624 = vmatpush1.bf16.msra.mxu0 %v537
    %625 = vmatprep.subr.bf16.mxu0 0
    %626 = vmatpush1.bf16.msra.mxu0 %v538
    %627 = vmatprep.subr.bf16.mxu0 0
    %628 = vmatpush1.bf16.msra.mxu0 %v539
    %629 = vmatprep.subr.bf16.mxu0 0
    %630 = vmatpush1.bf16.msra.mxu0 %v540
    %631 = vmatprep.subr.bf16.mxu0 0
    %632 = vmatpush1.bf16.msra.mxu0 %v541
    %633 = vmatprep.subr.bf16.mxu0 0
    %634 = vmatpush1.bf16.msra.mxu0 %v542
    %635 = vmatprep.subr.bf16.mxu0 0
    %636 = vmatpush1.bf16.msra.mxu0 %v543
    %637 = vmatprep.subr.bf16.mxu0 0
    %638 = vmatpush1.bf16.msra.mxu0 %v544
    %639 = vmatprep.subr.bf16.mxu0 0
    %640 = vmatpush1.bf16.msra.mxu0 %v545
    %641 = vmatprep.subr.bf16.mxu0 0
    %642 = vmatpush1.bf16.msra.mxu0 %v546
    %643 = vmatprep.mubr.bf16.mxu0 %v282
    %644 = vmatmul.mubr.bf16.gmra.mrb[0].mxu0 %v281
    %v645 = vpop.f32.mrb[0].mxu0
    %v646 = vadd.f32 0.0, %v645
    %v647 = vpop.f32.mrb[0].mxu0
    %v648 = vpop.f32.mrb[0].mxu0
    %v649 = vadd.f32 0.0, %v648
    %v650 = vpop.f32.mrb[0].mxu0
    %651 = vmatprep.mubr.bf16.mxu0 %v287
    %652 = vmatmul.mubr.bf16.gmra.mrb[0].mxu0 %v286
    %v653 = vpop.f32.mrb[0].mxu0
    %v654 = vadd.f32 0.0, %v653
    %v655 = vpop.f32.mrb[0].mxu0
    %v656 = vpop.f32.mrb[0].mxu0
    %v657 = vadd.f32 0.0, %v656
    %v658 = vpop.f32.mrb[0].mxu0
    %659 = vdwg.mxu0
    %660 = vmatprep.subr.bf16.mxu0 0
    %661 = vmatpush1.bf16.msra.mxu0 %v547
    %662 = vmatprep.subr.bf16.mxu0 0
    %663 = vmatpush1.bf16.msra.mxu0 %v548
    %664 = vmatprep.subr.bf16.mxu0 0
    %665 = vmatpush1.bf16.msra.mxu0 %v549
    %666 = vmatprep.subr.bf16.mxu0 0
    %667 = vmatpush1.bf16.msra.mxu0 %v550
    %668 = vmatprep.subr.bf16.mxu0 0
    %669 = vmatpush1.bf16.msra.mxu0 %v551
    %670 = vmatprep.subr.bf16.mxu0 0
    %671 = vmatpush1.bf16.msra.mxu0 %v552
    %672 = vmatprep.subr.bf16.mxu0 0
    %673 = vmatpush1.bf16.msra.mxu0 %v553
    %674 = vmatprep.subr.bf16.mxu0 0
    %675 = vmatpush1.bf16.msra.mxu0 %v554
    %676 = vmatprep.subr.bf16.mxu0 0
    %677 = vmatpush1.bf16.msra.mxu0 %v555
    %678 = vmatprep.subr.bf16.mxu0 0
    %679 = vmatpush1.bf16.msra.mxu0 %v556
    %680 = vmatprep.subr.bf16.mxu0 0
    %681 = vmatpush1.bf16.msra.mxu0 %v557
    %682 = vmatprep.subr.bf16.mxu0 0
    %683 = vmatpush1.bf16.msra.mxu0 %v558
    %684 = vmatprep.subr.bf16.mxu0 0
    %685 = vmatpush1.bf16.msra.mxu0 %v559
    %686 = vmatprep.subr.bf16.mxu0 0
    %687 = vmatpush1.bf16.msra.mxu0 %v560
    %688 = vmatprep.subr.bf16.mxu0 0
    %689 = vmatpush1.bf16.msra.mxu0 %v561
    %690 = vmatprep.subr.bf16.mxu0 0
    %691 = vmatpush1.bf16.msra.mxu0 %v562
    %692 = vmatprep.mubr.bf16.mxu0 %v284
    %693 = vmatmul.mubr.bf16.gmra.mrb[0].mxu0 %v283
    %v694 = vpop.f32.mrb[0].mxu0
    %v695 = vadd.f32 %v646, %v694
    %v696 = vpop.f32.mrb[0].mxu0
    %v697 = vpop.f32.mrb[0].mxu0
    %v698 = vadd.f32 %v649, %v697
    %v699 = vpop.f32.mrb[0].mxu0
    %700 = vmatprep.mubr.bf16.mxu0 %v289
    %701 = vmatmul.mubr.bf16.gmra.mrb[0].mxu0 %v288
    %v702 = vpop.f32.mrb[0].mxu0
    %v703 = vadd.f32 %v654, %v702
    %v704 = vpop.f32.mrb[0].mxu0
    %v705 = vpop.f32.mrb[0].mxu0
    %v706 = vadd.f32 %v657, %v705
    %v707 = vpop.f32.mrb[0].mxu0
    %708 = vdwg.mxu0
    %709 = vmatprep.subr.bf16.mxu0 0
    %710 = vmatpush1.bf16.msra.mxu0 %v563
    %711 = vmatprep.subr.bf16.mxu0 0
    %712 = vmatpush1.bf16.msra.mxu0 %v564
    %713 = vmatprep.subr.bf16.mxu0 0
    %714 = vmatpush1.bf16.msra.mxu0 %v565
    %715 = vmatprep.subr.bf16.mxu0 0
    %716 = vmatpush1.bf16.msra.mxu0 %v566
    %717 = vmatprep.subr.bf16.mxu0 0
    %718 = vmatpush1.bf16.msra.mxu0 %v567
    %719 = vmatprep.subr.bf16.mxu0 0
    %720 = vmatpush1.bf16.msra.mxu0 %v568
    %721 = vmatprep.subr.bf16.mxu0 0
    %722 = vmatpush1.bf16.msra.mxu0 %v569
    %723 = vmatprep.subr.bf16.mxu0 0
    %724 = vmatpush1.bf16.msra.mxu0 %v570
    %725 = vmatprep.subr.bf16.mxu0 0
    %726 = vmatpush1.bf16.msra.mxu0 0
    %727 = vmatprep.subr.bf16.mxu0 0
    %728 = vmatpush1.bf16.msra.mxu0 0
    %729 = vmatprep.subr.bf16.mxu0 0
    %730 = vmatpush1.bf16.msra.mxu0 0
    %731 = vmatprep.subr.bf16.mxu0 0
    %732 = vmatpush1.bf16.msra.mxu0 0
    %733 = vmatprep.subr.bf16.mxu0 0
    %734 = vmatpush1.bf16.msra.mxu0 0
    %735 = vmatprep.subr.bf16.mxu0 0
    %736 = vmatpush1.bf16.msra.mxu0 0
    %737 = vmatprep.subr.bf16.mxu0 0
    %738 = vmatpush1.bf16.msra.mxu0 0
    %739 = vmatprep.subr.bf16.mxu0 0
    %740 = vmatpush1.bf16.msra.mxu0 0
    %741 = vmatprep.mubr.bf16.mxu0 0
    %742 = vmatmul.mubr.bf16.gmra.mrb[0].mxu0 %v285
    %v743 = vpop.f32.mrb[0].mxu0
    %v744 = vadd.f32 %v695, %v743
    %v745 = vpop.f32.mrb[0].mxu0
    %v746 = vpop.f32.mrb[0].mxu0
    %v747 = vadd.f32 %v698, %v746
    %v748 = vpop.f32.mrb[0].mxu0
    %749 = vmatprep.mubr.bf16.mxu0 0
    %750 = vmatmul.mubr.bf16.gmra.mrb[0].mxu0 %v290
    %v751 = vpop.f32.mrb[0].mxu0
    %v752 = vadd.f32 %v703, %v751
    %v753 = vpop.f32.mrb[0].mxu0
    %v754 = vpop.f32.mrb[0].mxu0
    %v755 = vadd.f32 %v706, %v754
    %v756 = vpop.f32.mrb[0].mxu0
    %757 = vdwg.mxu0
    %v758 = vadd.f32 %v744, %v747
    %v759 = vadd.f32 %v758, %v752
    %v760 = vadd.f32 %v759, %v755
    %v761 = vrot.slane %v760, 4
    %v762 = vadd.f32 %v760, %v761
    %v763 = vrot.slane %v762, 2
    %v764 = vadd.f32 %v762, %v763
    %v765 = vrot.slane %v764, 1
    %v766 = vadd.f32 %v764, %v765
    %v767 = vmul.f32 %v744, %v744
    %v768 = vmul.f32 %v747, %v747
    %v769 = vmul.f32 %v752, %v752
    %v770 = vmul.f32 %v755, %v755
    %v771 = vadd.f32 %v767, %v768
    %v772 = vadd.f32 %v771, %v769
    %v773 = vadd.f32 %v772, %v770
    %v774 = vrot.slane %v773, 4
    %v775 = vadd.f32 %v773, %v774
    %v776 = vrot.slane %v775, 2
    %v777 = vadd.f32 %v775, %v776
    %v778 = vrot.slane %v777, 1
    %v779 = vadd.f32 %v777, %v778
    %780 = vrot.lane.b32.xlu0 %v766, 8
    %v781 = vpop.permute.xlu0 %780
    %v782 = vadd.f32 %v766, %v781
    %783 = vrot.lane.b32.xlu0 %v779, 8
    %v784 = vpop.permute.xlu0 %783
    %v785 = vadd.f32 %v779, %v784
    %786 = vrot.lane.b32.xlu0 %v782, 16
    %v787 = vpop.permute.xlu0 %786
    %v788 = vadd.f32 %v782, %v787
    %789 = vrot.lane.b32.xlu0 %v785, 16
    %v790 = vpop.permute.xlu0 %789
    %v791 = vadd.f32 %v785, %v790
    %792 = vrot.lane.b32.xlu0 %v788, 32
    %v793 = vpop.permute.xlu0 %792
    %v794 = vadd.f32 %v788, %v793
    %795 = vrot.lane.b32.xlu0 %v791, 32
    %v796 = vpop.permute.xlu0 %795
    %v797 = vadd.f32 %v791, %v796
    %798 = vrot.lane.b32.xlu0 %v794, 64
    %v799 = vpop.permute.xlu0 %798
    %v800 = vadd.f32 %v794, %v799
    %801 = vrot.lane.b32.xlu0 %v797, 64
    %v802 = vpop.permute.xlu0 %801
    %v803 = vadd.f32 %v797, %v802
    %v804 = vmul.f32 %v800, 0.001953125
    %v805 = vmul.f32 %v803, 0.001953125
    %v806 = vmul.f32 %v804, %v804
    %v807 = vsub.f32 %v805, %v806
    %v808 = vld [vmem:[%s3] sm:$0x1]
    %v809 = vadd.f32 %v807, 1e-05
    %v810 = vrsqrt.pop %v809
    %v811 = vmul.f32 %v808, %v810
    %v812 = vld [vmem:[%s4] sm:$0x1]
    %v813 = vmul.f32 %v804, %v811
    %v814 = vsub.f32 %v812, %v813
    %v816 = vlaneseq
    %v817 = vshrl.u32 %v816, 7
    %v818 = vsub.s32 0, %v817
    %v819 = vrot.slane %v811, %v818
    %v821 = vmul.f32 %v744, %v819
    %v822 = vmul.f32 %v747, %v819
    %v823 = vmul.f32 %v752, %v819
    %v824 = vmul.f32 %v755, %v819
    %v826 = vlaneseq
    %v827 = vshrl.u32 %v826, 7
    %v828 = vsub.s32 0, %v827
    %v829 = vrot.slane %v814, %v828
    %v831 = vadd.f32 %v821, %v829
    %v832 = vadd.f32 %v822, %v829
    %v833 = vadd.f32 %v823, %v829
    %v834 = vadd.f32 %v824, %v829
    %v835 = vmax.f32 %v831, 0.0
    %v836 = vmax.f32 %v832, 0.0
    %v837 = vmax.f32 %v833, 0.0
    %v838 = vmax.f32 %v834, 0.0
    %v839 = vpack.c.bf16 %v836, %v835
    %v840 = vpack.c.bf16 %v838, %v837
    %v841 = vld [vmem:[%s5] sm:$0xf]
    %v842 = vld [vmem:[%s5 + $0x4] sm:$0xf]
    %v843 = vld [vmem:[%s5 + $0x8] sm:$0xf]
    %v844 = vld [vmem:[%s5 + $0xc] sm:$0xf]
    %v845 = vld [vmem:[%s5 + $0x10] sm:$0xf]
    %v846 = vld [vmem:[%s5 + $0x14] sm:$0xf]
    %v847 = vld [vmem:[%s5 + $0x18] sm:$0xf]
    %v848 = vld [vmem:[%s5 + $0x1c] sm:$0xf]
    %v849 = vld [vmem:[%s5 + $0x20] sm:$0xf]
    %v850 = vld [vmem:[%s5 + $0x24] sm:$0xf]
    %v861 = vunpack.c.l.b16 %v841
    %v862 = vunpack.c.l.b16 %v842
    %v863 = vunpack.c.l.b16 %v843
    %v864 = vunpack.c.l.b16 %v844
    %v865 = vunpack.c.l.b16 %v845
    %v866 = vunpack.c.l.b16 %v846
    %v867 = vunpack.c.l.b16 %v847
    %v868 = vunpack.c.l.b16 %v848
    %v869 = vunpack.c.l.b16 %v849
    %v870 = vunpack.c.l.b16 %v850
    %v871 = vpack.c.b16 %v862, %v861
    %v872 = vpack.c.b16 %v864, %v863
    %v873 = vpack.c.b16 %v866, %v865
    %v874 = vpack.c.b16 %v868, %v867
    %v875 = vpack.c.b16 %v870, %v869
    %vm876 = vcmask 261120
    %v878 = vsel %vm876, %v871, 0
    %v881 = vsel %vm876, %v872, 0
    %v884 = vsel %vm876, %v873, 0
    %v887 = vsel %vm876, %v874, 0
    %v890 = vsel %vm876, %v875, 0
    %892 = vmatprep.subr.bf16.mxu0 0
    %893 = vmatpush1.bf16.msra.mxu0 %v839
    %894 = vmatprep.subr.bf16.mxu0 0
    %895 = vmatpush1.bf16.msra.mxu0 %v840
    %896 = vmatprep.subr.bf16.mxu0 0
    %897 = vmatpush1.bf16.msra.mxu0 0
    %898 = vmatprep.subr.bf16.mxu0 0
    %899 = vmatpush1.bf16.msra.mxu0 0
    %900 = vmatprep.subr.bf16.mxu0 0
    %901 = vmatpush1.bf16.msra.mxu0 0
    %902 = vmatprep.subr.bf16.mxu0 0
    %903 = vmatpush1.bf16.msra.mxu0 0
    %904 = vmatprep.subr.bf16.mxu0 0
    %905 = vmatpush1.bf16.msra.mxu0 0
    %906 = vmatprep.subr.bf16.mxu0 0
    %907 = vmatpush1.bf16.msra.mxu0 0
    %908 = vmatprep.subr.bf16.mxu0 0
    %909 = vmatpush1.bf16.msra.mxu0 0
    %910 = vmatprep.subr.bf16.mxu0 0
    %911 = vmatpush1.bf16.msra.mxu0 0
    %912 = vmatprep.subr.bf16.mxu0 0
    %913 = vmatpush1.bf16.msra.mxu0 0
    %914 = vmatprep.subr.bf16.mxu0 0
    %915 = vmatpush1.bf16.msra.mxu0 0
    %916 = vmatprep.subr.bf16.mxu0 0
    %917 = vmatpush1.bf16.msra.mxu0 0
    %918 = vmatprep.subr.bf16.mxu0 0
    %919 = vmatpush1.bf16.msra.mxu0 0
    %920 = vmatprep.subr.bf16.mxu0 0
    %921 = vmatpush1.bf16.msra.mxu0 0
    %922 = vmatprep.subr.bf16.mxu0 0
    %923 = vmatpush1.bf16.msra.mxu0 0
    %924 = vmatprep.mubr.bf16.mxu0 0
    %925 = vmatmul.mubr.bf16.gmra.mrb[0].mxu0 %v878
    %v926 = vpop.f32.mrb[0].mxu0
    %v927 = vadd.f32 0.0, %v926
    %v928 = vpop.f32.mrb[0].mxu0
    %v929 = vpop.f32.mrb[0].mxu0
    %v930 = vadd.f32 0.0, %v929
    %v931 = vpop.f32.mrb[0].mxu0
    %932 = vmatprep.mubr.bf16.mxu0 0
    %933 = vmatmul.mubr.bf16.gmra.mrb[0].mxu0 %v881
    %v934 = vpop.f32.mrb[0].mxu0
    %v935 = vadd.f32 0.0, %v934
    %v936 = vpop.f32.mrb[0].mxu0
    %v937 = vpop.f32.mrb[0].mxu0
    %v938 = vadd.f32 0.0, %v937
    %v939 = vpop.f32.mrb[0].mxu0
    %940 = vmatprep.mubr.bf16.mxu0 0
    %941 = vmatmul.mubr.bf16.gmra.mrb[0].mxu0 %v884
    %v942 = vpop.f32.mrb[0].mxu0
    %v943 = vadd.f32 0.0, %v942
    %v944 = vpop.f32.mrb[0].mxu0
    %v945 = vpop.f32.mrb[0].mxu0
    %v946 = vadd.f32 0.0, %v945
    %v947 = vpop.f32.mrb[0].mxu0
    %948 = vmatprep.mubr.bf16.mxu0 0
    %949 = vmatmul.mubr.bf16.gmra.mrb[0].mxu0 %v887
    %v950 = vpop.f32.mrb[0].mxu0
    %v951 = vadd.f32 0.0, %v950
    %v952 = vpop.f32.mrb[0].mxu0
    %v953 = vpop.f32.mrb[0].mxu0
    %v954 = vadd.f32 0.0, %v953
    %v955 = vpop.f32.mrb[0].mxu0
    %956 = vmatprep.mubr.bf16.mxu0 0
    %957 = vmatmul.mubr.bf16.gmra.mrb[0].mxu0 %v890
    %v958 = vpop.f32.mrb[0].mxu0
    %v959 = vadd.f32 0.0, %v958
    %v960 = vpop.f32.mrb[0].mxu0
    %v961 = vpop.f32.mrb[0].mxu0
    %v962 = vadd.f32 0.0, %v961
    %v963 = vpop.f32.mrb[0].mxu0
    %964 = vdwg.mxu0
    %v965 = vpack.c.bf16 %v930, %v927
    %v966 = vpack.c.bf16 %v938, %v935
    %v967 = vpack.c.bf16 %v946, %v943
    %v968 = vpack.c.bf16 %v954, %v951
    %v969 = vpack.c.bf16 %v962, %v959
    %v970 = vld [vmem:[%s6] sm:$0xf]
    %v971 = vld [vmem:[%s6 + $0x4] sm:$0xf]
    %v972 = vld [vmem:[%s6 + $0x8] sm:$0xf]
    %v973 = vld [vmem:[%s6 + $0xc] sm:$0xf]
    %v974 = vld [vmem:[%s6 + $0x10] sm:$0xf]
    %v975 = vld [vmem:[%s6 + $0x14] sm:$0xf]
    %v976 = vld [vmem:[%s6 + $0x18] sm:$0xf]
    %v977 = vld [vmem:[%s6 + $0x1c] sm:$0xf]
    %v978 = vld [vmem:[%s6 + $0x20] sm:$0xf]
    %v979 = vld [vmem:[%s6 + $0x24] sm:$0xf]
    %v980 = vld [vmem:[%s6 + $0x28] sm:$0xf]
    %v981 = vld [vmem:[%s6 + $0x2c] sm:$0xf]
    %v982 = vld [vmem:[%s6 + $0x30] sm:$0xf]
    %v983 = vld [vmem:[%s6 + $0x34] sm:$0xf]
    %v984 = vld [vmem:[%s6 + $0x38] sm:$0xf]
    %v985 = vld [vmem:[%s6 + $0x3c] sm:$0xf]
    %v986 = vld [vmem:[%s6 + $0x40] sm:$0xf]
    %v987 = vld [vmem:[%s6 + $0x44] sm:$0xf]
    %v988 = vld [vmem:[%s6 + $0x48] sm:$0xf]
    %v989 = vld [vmem:[%s6 + $0x4c] sm:$0xf]
    %v990 = vld [vmem:[%s6 + $0x50] sm:$0xf]
    %v991 = vld [vmem:[%s6 + $0x54] sm:$0xf]
    %v992 = vld [vmem:[%s6 + $0x58] sm:$0xf]
    %v993 = vld [vmem:[%s6 + $0x5c] sm:$0xf]
    %v994 = vld [vmem:[%s6 + $0x60] sm:$0xf]
    %v995 = vld [vmem:[%s6 + $0x64] sm:$0xf]
    %v996 = vld [vmem:[%s6 + $0x68] sm:$0xf]
    %v997 = vld [vmem:[%s6 + $0x6c] sm:$0xf]
    %v998 = vld [vmem:[%s6 + $0x70] sm:$0xf]
    %v999 = vld [vmem:[%s6 + $0x74] sm:$0xf]
    %v1000 = vld [vmem:[%s6 + $0x78] sm:$0xf]
    %v1001 = vld [vmem:[%s6 + $0x7c] sm:$0xf]
    %v1002 = vld [vmem:[%s6 + $0x80] sm:$0xf]
    %v1003 = vld [vmem:[%s6 + $0x84] sm:$0xf]
    %v1004 = vld [vmem:[%s6 + $0x88] sm:$0xf]
    %v1005 = vld [vmem:[%s6 + $0x8c] sm:$0xf]
    %v1006 = vld [vmem:[%s6 + $0x90] sm:$0xf]
    %v1007 = vld [vmem:[%s6 + $0x94] sm:$0xf]
    %v1008 = vld [vmem:[%s6 + $0x98] sm:$0xf]
    %v1009 = vld [vmem:[%s6 + $0x9c] sm:$0xf]
    %v1010 = vld [vmem:[%s6 + $0xa0] sm:$0xf]
    %v1011 = vld [vmem:[%s6 + $0xa4] sm:$0xf]
    %v1012 = vld [vmem:[%s6 + $0xa8] sm:$0xf]
    %v1013 = vld [vmem:[%s6 + $0xac] sm:$0xf]
    %v1014 = vld [vmem:[%s6 + $0xb0] sm:$0xf]
    %v1015 = vld [vmem:[%s6 + $0xb4] sm:$0xf]
    %v1016 = vld [vmem:[%s6 + $0xb8] sm:$0xf]
    %v1017 = vld [vmem:[%s6 + $0xbc] sm:$0xf]
    %v1018 = vld [vmem:[%s6 + $0xc0] sm:$0xf]
    %v1019 = vld [vmem:[%s6 + $0xc4] sm:$0xf]
    %v1020 = vld [vmem:[%s6 + $0xc8] sm:$0xf]
    %v1021 = vld [vmem:[%s6 + $0xcc] sm:$0xf]
    %v1022 = vld [vmem:[%s6 + $0xd0] sm:$0xf]
    %v1023 = vld [vmem:[%s6 + $0xd4] sm:$0xf]
    %v1024 = vld [vmem:[%s6 + $0xd8] sm:$0xf]
    %v1025 = vld [vmem:[%s6 + $0xdc] sm:$0xf]
    %v1026 = vld [vmem:[%s6 + $0xe0] sm:$0xf]
    %v1027 = vld [vmem:[%s6 + $0xe4] sm:$0xf]
    %v1028 = vld [vmem:[%s6 + $0xe8] sm:$0xf]
    %v1029 = vld [vmem:[%s6 + $0xec] sm:$0xf]
    %v1030 = vld [vmem:[%s6 + $0xf0] sm:$0xf]
    %v1031 = vld [vmem:[%s6 + $0xf4] sm:$0xf]
    %v1032 = vld [vmem:[%s6 + $0xf8] sm:$0xf]
    %v1033 = vld [vmem:[%s6 + $0xfc] sm:$0xf]
    %v1034 = vld [vmem:[%s6 + $0x100] sm:$0xf]
    %v1035 = vld [vmem:[%s6 + $0x104] sm:$0xf]
    %v1036 = vld [vmem:[%s6 + $0x108] sm:$0xf]
    %v1037 = vld [vmem:[%s6 + $0x10c] sm:$0xf]
    %v1038 = vld [vmem:[%s6 + $0x110] sm:$0xf]
    %v1039 = vld [vmem:[%s6 + $0x114] sm:$0xf]
    %v1040 = vld [vmem:[%s6 + $0x118] sm:$0xf]
    %v1041 = vld [vmem:[%s6 + $0x11c] sm:$0xf]
    %v1042 = vld [vmem:[%s6 + $0x120] sm:$0xf]
    %v1043 = vld [vmem:[%s6 + $0x124] sm:$0xf]
    %v1044 = vld [vmem:[%s6 + $0x128] sm:$0xf]
    %v1045 = vld [vmem:[%s6 + $0x12c] sm:$0xf]
    %v1046 = vld [vmem:[%s6 + $0x130] sm:$0xf]
    %v1047 = vld [vmem:[%s6 + $0x134] sm:$0xf]
    %v1048 = vld [vmem:[%s6 + $0x138] sm:$0xf]
    %v1049 = vld [vmem:[%s6 + $0x13c] sm:$0xf]
    %v1130 = vunpack.c.l.b16 %v970
    %v1131 = vunpack.c.l.b16 %v971
    %v1132 = vunpack.c.l.b16 %v972
    %v1133 = vunpack.c.l.b16 %v973
    %v1134 = vunpack.c.l.b16 %v974
    %v1135 = vunpack.c.l.b16 %v975
    %v1136 = vunpack.c.l.b16 %v976
    %v1137 = vunpack.c.l.b16 %v977
    %v1138 = vunpack.c.l.b16 %v978
    %v1139 = vunpack.c.l.b16 %v979
    %v1140 = vunpack.c.l.b16 %v980
    %v1141 = vunpack.c.l.b16 %v981
    %v1142 = vunpack.c.l.b16 %v982
    %v1143 = vunpack.c.l.b16 %v983
    %v1144 = vunpack.c.l.b16 %v984
    %v1145 = vunpack.c.l.b16 %v985
    %v1146 = vunpack.c.l.b16 %v986
    %v1147 = vunpack.c.l.b16 %v987
    %v1148 = vunpack.c.l.b16 %v988
    %v1149 = vunpack.c.l.b16 %v989
    %v1150 = vunpack.c.l.b16 %v990
    %v1151 = vunpack.c.l.b16 %v991
    %v1152 = vunpack.c.l.b16 %v992
    %v1153 = vunpack.c.l.b16 %v993
    %v1154 = vunpack.c.l.b16 %v994
    %v1155 = vunpack.c.l.b16 %v995
    %v1156 = vunpack.c.l.b16 %v996
    %v1157 = vunpack.c.l.b16 %v997
    %v1158 = vunpack.c.l.b16 %v998
    %v1159 = vunpack.c.l.b16 %v999
    %v1160 = vunpack.c.l.b16 %v1000
    %v1161 = vunpack.c.l.b16 %v1001
    %v1162 = vunpack.c.l.b16 %v1002
    %v1163 = vunpack.c.l.b16 %v1003
    %v1164 = vunpack.c.l.b16 %v1004
    %v1165 = vunpack.c.l.b16 %v1005
    %v1166 = vunpack.c.l.b16 %v1006
    %v1167 = vunpack.c.l.b16 %v1007
    %v1168 = vunpack.c.l.b16 %v1008
    %v1169 = vunpack.c.l.b16 %v1009
    %v1170 = vunpack.c.l.b16 %v1010
    %v1171 = vunpack.c.l.b16 %v1011
    %v1172 = vunpack.c.l.b16 %v1012
    %v1173 = vunpack.c.l.b16 %v1013
    %v1174 = vunpack.c.l.b16 %v1014
    %v1175 = vunpack.c.l.b16 %v1015
    %v1176 = vunpack.c.l.b16 %v1016
    %v1177 = vunpack.c.l.b16 %v1017
    %v1178 = vunpack.c.l.b16 %v1018
    %v1179 = vunpack.c.l.b16 %v1019
    %v1180 = vunpack.c.l.b16 %v1020
    %v1181 = vunpack.c.l.b16 %v1021
    %v1182 = vunpack.c.l.b16 %v1022
    %v1183 = vunpack.c.l.b16 %v1023
    %v1184 = vunpack.c.l.b16 %v1024
    %v1185 = vunpack.c.l.b16 %v1025
    %v1186 = vunpack.c.l.b16 %v1026
    %v1187 = vunpack.c.l.b16 %v1027
    %v1188 = vunpack.c.l.b16 %v1028
    %v1189 = vunpack.c.l.b16 %v1029
    %v1190 = vunpack.c.l.b16 %v1030
    %v1191 = vunpack.c.l.b16 %v1031
    %v1192 = vunpack.c.l.b16 %v1032
    %v1193 = vunpack.c.l.b16 %v1033
    %v1194 = vunpack.c.l.b16 %v1034
    %v1195 = vunpack.c.l.b16 %v1035
    %v1196 = vunpack.c.l.b16 %v1036
    %v1197 = vunpack.c.l.b16 %v1037
    %v1198 = vunpack.c.l.b16 %v1038
    %v1199 = vunpack.c.l.b16 %v1039
    %v1200 = vunpack.c.l.b16 %v1040
    %v1201 = vunpack.c.l.b16 %v1041
    %v1202 = vunpack.c.l.b16 %v1042
    %v1203 = vunpack.c.l.b16 %v1043
    %v1204 = vunpack.c.l.b16 %v1044
    %v1205 = vunpack.c.l.b16 %v1045
    %v1206 = vunpack.c.l.b16 %v1046
    %v1207 = vunpack.c.l.b16 %v1047
    %v1208 = vunpack.c.l.b16 %v1048
    %v1209 = vunpack.c.l.b16 %v1049
    %v1210 = vpack.c.b16 %v1131, %v1130
    %v1211 = vpack.c.b16 %v1133, %v1132
    %v1212 = vpack.c.b16 %v1135, %v1134
    %v1213 = vpack.c.b16 %v1137, %v1136
    %v1214 = vpack.c.b16 %v1139, %v1138
    %v1215 = vpack.c.b16 %v1141, %v1140
    %v1216 = vpack.c.b16 %v1143, %v1142
    %v1217 = vpack.c.b16 %v1145, %v1144
    %v1218 = vpack.c.b16 %v1147, %v1146
    %v1219 = vpack.c.b16 %v1149, %v1148
    %v1220 = vpack.c.b16 %v1151, %v1150
    %v1221 = vpack.c.b16 %v1153, %v1152
    %v1222 = vpack.c.b16 %v1155, %v1154
    %v1223 = vpack.c.b16 %v1157, %v1156
    %v1224 = vpack.c.b16 %v1159, %v1158
    %v1225 = vpack.c.b16 %v1161, %v1160
    %v1226 = vpack.c.b16 %v1163, %v1162
    %v1227 = vpack.c.b16 %v1165, %v1164
    %v1228 = vpack.c.b16 %v1167, %v1166
    %v1229 = vpack.c.b16 %v1169, %v1168
    %v1230 = vpack.c.b16 %v1171, %v1170
    %v1231 = vpack.c.b16 %v1173, %v1172
    %v1232 = vpack.c.b16 %v1175, %v1174
    %v1233 = vpack.c.b16 %v1177, %v1176
    %v1234 = vpack.c.b16 %v1179, %v1178
    %v1235 = vpack.c.b16 %v1181, %v1180
    %v1236 = vpack.c.b16 %v1183, %v1182
    %v1237 = vpack.c.b16 %v1185, %v1184
    %v1238 = vpack.c.b16 %v1187, %v1186
    %v1239 = vpack.c.b16 %v1189, %v1188
    %v1240 = vpack.c.b16 %v1191, %v1190
    %v1241 = vpack.c.b16 %v1193, %v1192
    %v1242 = vpack.c.b16 %v1195, %v1194
    %v1243 = vpack.c.b16 %v1197, %v1196
    %v1244 = vpack.c.b16 %v1199, %v1198
    %v1245 = vpack.c.b16 %v1201, %v1200
    %v1246 = vpack.c.b16 %v1203, %v1202
    %v1247 = vpack.c.b16 %v1205, %v1204
    %v1248 = vpack.c.b16 %v1207, %v1206
    %v1249 = vpack.c.b16 %v1209, %v1208
    %1290 = vmatprep.subr.bf16.mxu0 0
    %1291 = vmatpush1.bf16.msra.mxu0 %v1210
    %1292 = vmatprep.subr.bf16.mxu0 0
    %1293 = vmatpush1.bf16.msra.mxu0 %v1211
    %1294 = vmatprep.subr.bf16.mxu0 0
    %1295 = vmatpush1.bf16.msra.mxu0 %v1212
    %1296 = vmatprep.subr.bf16.mxu0 0
    %1297 = vmatpush1.bf16.msra.mxu0 %v1213
    %1298 = vmatprep.subr.bf16.mxu0 0
    %1299 = vmatpush1.bf16.msra.mxu0 %v1214
    %1300 = vmatprep.subr.bf16.mxu0 0
    %1301 = vmatpush1.bf16.msra.mxu0 %v1215
    %1302 = vmatprep.subr.bf16.mxu0 0
    %1303 = vmatpush1.bf16.msra.mxu0 %v1216
    %1304 = vmatprep.subr.bf16.mxu0 0
    %1305 = vmatpush1.bf16.msra.mxu0 %v1217
    %1306 = vmatprep.subr.bf16.mxu0 0
    %1307 = vmatpush1.bf16.msra.mxu0 %v1218
    %1308 = vmatprep.subr.bf16.mxu0 0
    %1309 = vmatpush1.bf16.msra.mxu0 %v1219
    %1310 = vmatprep.subr.bf16.mxu0 0
    %1311 = vmatpush1.bf16.msra.mxu0 %v1220
    %1312 = vmatprep.subr.bf16.mxu0 0
    %1313 = vmatpush1.bf16.msra.mxu0 %v1221
    %1314 = vmatprep.subr.bf16.mxu0 0
    %1315 = vmatpush1.bf16.msra.mxu0 %v1222
    %1316 = vmatprep.subr.bf16.mxu0 0
    %1317 = vmatpush1.bf16.msra.mxu0 %v1223
    %1318 = vmatprep.subr.bf16.mxu0 0
    %1319 = vmatpush1.bf16.msra.mxu0 %v1224
    %1320 = vmatprep.subr.bf16.mxu0 0
    %1321 = vmatpush1.bf16.msra.mxu0 %v1225
    %1322 = vmatprep.mubr.bf16.mxu0 %v966
    %1323 = vmatmul.mubr.bf16.gmra.mrb[0].mxu0 %v965
    %v1324 = vpop.f32.mrb[0].mxu0
    %v1325 = vadd.f32 0.0, %v1324
    %v1326 = vpop.f32.mrb[0].mxu0
    %v1327 = vpop.f32.mrb[0].mxu0
    %v1328 = vadd.f32 0.0, %v1327
    %v1329 = vpop.f32.mrb[0].mxu0
    %1330 = vdwg.mxu0
    %1331 = vmatprep.subr.bf16.mxu0 0
    %1332 = vmatpush1.bf16.msra.mxu0 %v1226
    %1333 = vmatprep.subr.bf16.mxu0 0
    %1334 = vmatpush1.bf16.msra.mxu0 %v1227
    %1335 = vmatprep.subr.bf16.mxu0 0
    %1336 = vmatpush1.bf16.msra.mxu0 %v1228
    %1337 = vmatprep.subr.bf16.mxu0 0
    %1338 = vmatpush1.bf16.msra.mxu0 %v1229
    %1339 = vmatprep.subr.bf16.mxu0 0
    %1340 = vmatpush1.bf16.msra.mxu0 %v1230
    %1341 = vmatprep.subr.bf16.mxu0 0
    %1342 = vmatpush1.bf16.msra.mxu0 %v1231
    %1343 = vmatprep.subr.bf16.mxu0 0
    %1344 = vmatpush1.bf16.msra.mxu0 %v1232
    %1345 = vmatprep.subr.bf16.mxu0 0
    %1346 = vmatpush1.bf16.msra.mxu0 %v1233
    %1347 = vmatprep.subr.bf16.mxu0 0
    %1348 = vmatpush1.bf16.msra.mxu0 %v1234
    %1349 = vmatprep.subr.bf16.mxu0 0
    %1350 = vmatpush1.bf16.msra.mxu0 %v1235
    %1351 = vmatprep.subr.bf16.mxu0 0
    %1352 = vmatpush1.bf16.msra.mxu0 %v1236
    %1353 = vmatprep.subr.bf16.mxu0 0
    %1354 = vmatpush1.bf16.msra.mxu0 %v1237
    %1355 = vmatprep.subr.bf16.mxu0 0
    %1356 = vmatpush1.bf16.msra.mxu0 %v1238
    %1357 = vmatprep.subr.bf16.mxu0 0
    %1358 = vmatpush1.bf16.msra.mxu0 %v1239
    %1359 = vmatprep.subr.bf16.mxu0 0
    %1360 = vmatpush1.bf16.msra.mxu0 %v1240
    %1361 = vmatprep.subr.bf16.mxu0 0
    %1362 = vmatpush1.bf16.msra.mxu0 %v1241
    %1363 = vmatprep.mubr.bf16.mxu0 %v968
    %1364 = vmatmul.mubr.bf16.gmra.mrb[0].mxu0 %v967
    %v1365 = vpop.f32.mrb[0].mxu0
    %v1366 = vadd.f32 %v1325, %v1365
    %v1367 = vpop.f32.mrb[0].mxu0
    %v1368 = vpop.f32.mrb[0].mxu0
    %v1369 = vadd.f32 %v1328, %v1368
    %v1370 = vpop.f32.mrb[0].mxu0
    %1371 = vdwg.mxu0
    %1372 = vmatprep.subr.bf16.mxu0 0
    %1373 = vmatpush1.bf16.msra.mxu0 %v1242
    %1374 = vmatprep.subr.bf16.mxu0 0
    %1375 = vmatpush1.bf16.msra.mxu0 %v1243
    %1376 = vmatprep.subr.bf16.mxu0 0
    %1377 = vmatpush1.bf16.msra.mxu0 %v1244
    %1378 = vmatprep.subr.bf16.mxu0 0
    %1379 = vmatpush1.bf16.msra.mxu0 %v1245
    %1380 = vmatprep.subr.bf16.mxu0 0
    %1381 = vmatpush1.bf16.msra.mxu0 %v1246
    %1382 = vmatprep.subr.bf16.mxu0 0
    %1383 = vmatpush1.bf16.msra.mxu0 %v1247
    %1384 = vmatprep.subr.bf16.mxu0 0
    %1385 = vmatpush1.bf16.msra.mxu0 %v1248
    %1386 = vmatprep.subr.bf16.mxu0 0
    %1387 = vmatpush1.bf16.msra.mxu0 %v1249
    %1388 = vmatprep.subr.bf16.mxu0 0
    %1389 = vmatpush1.bf16.msra.mxu0 0
    %1390 = vmatprep.subr.bf16.mxu0 0
    %1391 = vmatpush1.bf16.msra.mxu0 0
    %1392 = vmatprep.subr.bf16.mxu0 0
    %1393 = vmatpush1.bf16.msra.mxu0 0
    %1394 = vmatprep.subr.bf16.mxu0 0
    %1395 = vmatpush1.bf16.msra.mxu0 0
    %1396 = vmatprep.subr.bf16.mxu0 0
    %1397 = vmatpush1.bf16.msra.mxu0 0
    %1398 = vmatprep.subr.bf16.mxu0 0
    %1399 = vmatpush1.bf16.msra.mxu0 0
    %1400 = vmatprep.subr.bf16.mxu0 0
    %1401 = vmatpush1.bf16.msra.mxu0 0
    %1402 = vmatprep.subr.bf16.mxu0 0
    %1403 = vmatpush1.bf16.msra.mxu0 0
    %1404 = vmatprep.mubr.bf16.mxu0 0
    %1405 = vmatmul.mubr.bf16.gmra.mrb[0].mxu0 %v969
    %v1406 = vpop.f32.mrb[0].mxu0
    %v1407 = vadd.f32 %v1366, %v1406
    %v1408 = vpop.f32.mrb[0].mxu0
    %v1409 = vpop.f32.mrb[0].mxu0
    %v1410 = vadd.f32 %v1369, %v1409
    %v1411 = vpop.f32.mrb[0].mxu0
    %1412 = vdwg.mxu0
    %v1413 = vadd.f32 %v1407, %v1410
    %v1414 = vrot.slane %v1413, 4
    %v1415 = vadd.f32 %v1413, %v1414
    %v1416 = vrot.slane %v1415, 2
    %v1417 = vadd.f32 %v1415, %v1416
    %v1418 = vrot.slane %v1417, 1
    %v1419 = vadd.f32 %v1417, %v1418
    %v1420 = vmul.f32 %v1407, %v1407
    %v1421 = vmul.f32 %v1410, %v1410
    %v1422 = vadd.f32 %v1420, %v1421
    %v1423 = vrot.slane %v1422, 4
    %v1424 = vadd.f32 %v1422, %v1423
    %v1425 = vrot.slane %v1424, 2
    %v1426 = vadd.f32 %v1424, %v1425
    %v1427 = vrot.slane %v1426, 1
    %v1428 = vadd.f32 %v1426, %v1427
    %1429 = vrot.lane.b32.xlu0 %v1419, 16
    %v1430 = vpop.permute.xlu0 %1429
    %v1431 = vadd.f32 %v1419, %v1430
    %1432 = vrot.lane.b32.xlu0 %v1428, 16
    %v1433 = vpop.permute.xlu0 %1432
    %v1434 = vadd.f32 %v1428, %v1433
    %1435 = vrot.lane.b32.xlu0 %v1431, 32
    %v1436 = vpop.permute.xlu0 %1435
    %v1437 = vadd.f32 %v1431, %v1436
    %1438 = vrot.lane.b32.xlu0 %v1434, 32
    %v1439 = vpop.permute.xlu0 %1438
    %v1440 = vadd.f32 %v1434, %v1439
    %1441 = vrot.lane.b32.xlu0 %v1437, 64
    %v1442 = vpop.permute.xlu0 %1441
    %v1443 = vadd.f32 %v1437, %v1442
    %1444 = vrot.lane.b32.xlu0 %v1440, 64
    %v1445 = vpop.permute.xlu0 %1444
    %v1446 = vadd.f32 %v1440, %v1445
    %v1447 = vmul.f32 %v1443, 0.0078125
    %v1448 = vmul.f32 %v1446, 0.0078125
    %v1449 = vmul.f32 %v1447, %v1447
    %v1450 = vsub.f32 %v1448, %v1449
    %v1451 = vld [vmem:[%s7] sm:$0x1]
    %v1452 = vadd.f32 %v1450, 1e-05
    %v1453 = vrsqrt.pop %v1452
    %v1454 = vmul.f32 %v1451, %v1453
    %v1455 = vld [vmem:[%s8] sm:$0x1]
    %v1456 = vmul.f32 %v1447, %v1454
    %v1457 = vsub.f32 %v1455, %v1456
    %v1459 = vlaneseq
    %v1460 = vshrl.u32 %v1459, 7
    %v1461 = vsub.s32 0, %v1460
    %v1462 = vrot.slane %v1454, %v1461
    %v1464 = vmul.f32 %v1407, %v1462
    %v1465 = vmul.f32 %v1410, %v1462
    %v1467 = vlaneseq
    %v1468 = vshrl.u32 %v1467, 7
    %v1469 = vsub.s32 0, %v1468
    %v1470 = vrot.slane %v1457, %v1469
    %v1472 = vadd.f32 %v1464, %v1470
    %v1473 = vadd.f32 %v1465, %v1470
    %v1474 = vmax.f32 %v1472, 0.0
    %v1475 = vmax.f32 %v1473, 0.0
    %v1476 = vpack.c.bf16 %v1475, %v1474
    %v1477 = vld [vmem:[%s9] sm:$0xf]
    %v1478 = vld [vmem:[%s9 + $0x4] sm:$0xf]
    %v1479 = vld [vmem:[%s9 + $0x8] sm:$0xf]
    %v1480 = vld [vmem:[%s9 + $0xc] sm:$0xf]
    %v1481 = vld [vmem:[%s9 + $0x10] sm:$0xf]
    %v1487 = vunpack.c.l.b16 %v1477
    %v1488 = vunpack.c.l.b16 %v1478
    %v1489 = vunpack.c.l.b16 %v1479
    %v1490 = vunpack.c.l.b16 %v1480
    %v1491 = vunpack.c.l.b16 %v1481
    %v1492 = vpack.c.b16 %v1488, %v1487
    %v1493 = vpack.c.b16 %v1490, %v1489
    %v1494 = vpack.c.b16 %v1491, %v1491
    %vm1495 = vcmask 130048
    %v1497 = vsel %vm1495, %v1492, 0
    %v1500 = vsel %vm1495, %v1493, 0
    %v1503 = vsel %vm1495, %v1494, 0
    %1505 = vmatprep.subr.bf16.mxu0 0
    %1506 = vmatpush1.bf16.msra.mxu0 %v1476
    %1507 = vmatprep.subr.bf16.mxu0 0
    %1508 = vmatpush1.bf16.msra.mxu0 0
    %1509 = vmatprep.subr.bf16.mxu0 0
    %1510 = vmatpush1.bf16.msra.mxu0 0
    %1511 = vmatprep.subr.bf16.mxu0 0
    %1512 = vmatpush1.bf16.msra.mxu0 0
    %1513 = vmatprep.subr.bf16.mxu0 0
    %1514 = vmatpush1.bf16.msra.mxu0 0
    %1515 = vmatprep.subr.bf16.mxu0 0
    %1516 = vmatpush1.bf16.msra.mxu0 0
    %1517 = vmatprep.subr.bf16.mxu0 0
    %1518 = vmatpush1.bf16.msra.mxu0 0
    %1519 = vmatprep.subr.bf16.mxu0 0
    %1520 = vmatpush1.bf16.msra.mxu0 0
    %1521 = vmatprep.subr.bf16.mxu0 0
    %1522 = vmatpush1.bf16.msra.mxu0 0
    %1523 = vmatprep.subr.bf16.mxu0 0
    %1524 = vmatpush1.bf16.msra.mxu0 0
    %1525 = vmatprep.subr.bf16.mxu0 0
    %1526 = vmatpush1.bf16.msra.mxu0 0
    %1527 = vmatprep.subr.bf16.mxu0 0
    %1528 = vmatpush1.bf16.msra.mxu0 0
    %1529 = vmatprep.subr.bf16.mxu0 0
    %1530 = vmatpush1.bf16.msra.mxu0 0
    %1531 = vmatprep.subr.bf16.mxu0 0
    %1532 = vmatpush1.bf16.msra.mxu0 0
    %1533 = vmatprep.subr.bf16.mxu0 0
    %1534 = vmatpush1.bf16.msra.mxu0 0
    %1535 = vmatprep.subr.bf16.mxu0 0
    %1536 = vmatpush1.bf16.msra.mxu0 0
    %1537 = vmatprep.mubr.bf16.mxu0 0
    %1538 = vmatmul.mubr.bf16.gmra.mrb[0].mxu0 %v1497
    %v1539 = vpop.f32.mrb[0].mxu0
    %v1540 = vadd.f32 0.0, %v1539
    %v1541 = vpop.f32.mrb[0].mxu0
    %v1542 = vpop.f32.mrb[0].mxu0
    %v1543 = vadd.f32 0.0, %v1542
    %v1544 = vpop.f32.mrb[0].mxu0
    %1545 = vmatprep.mubr.bf16.mxu0 0
    %1546 = vmatmul.mubr.bf16.gmra.mrb[0].mxu0 %v1500
    %v1547 = vpop.f32.mrb[0].mxu0
    %v1548 = vadd.f32 0.0, %v1547
    %v1549 = vpop.f32.mrb[0].mxu0
    %v1550 = vpop.f32.mrb[0].mxu0
    %v1551 = vadd.f32 0.0, %v1550
    %v1552 = vpop.f32.mrb[0].mxu0
    %1553 = vmatprep.mubr.bf16.mxu0 0
    %1554 = vmatmul.mubr.bf16.gmra.mrb[0].mxu0 %v1503
    %v1555 = vpop.f32.mrb[0].mxu0
    %v1556 = vadd.f32 0.0, %v1555
    %v1557 = vpop.f32.mrb[0].mxu0
    %v1558 = vpop.f32.mrb[0].mxu0
    %v1559 = vpop.f32.mrb[0].mxu0
    %1560 = vdwg.mxu0
    %v1561 = vpack.c.bf16 %v1540, %v1540
    %v1562 = vpack.c.bf16 %v1543, %v1543
    %v1563 = vpack.c.bf16 %v1548, %v1548
    %v1564 = vpack.c.bf16 %v1551, %v1551
    %v1565 = vpack.c.bf16 %v1556, %v1556
    %v1566 = vld [vmem:[%s10] sm:$0xf]
    %v1567 = vld [vmem:[%s10 + $0x4] sm:$0xf]
    %v1568 = vld [vmem:[%s10 + $0x8] sm:$0xf]
    %v1569 = vld [vmem:[%s10 + $0xc] sm:$0xf]
    %v1570 = vld [vmem:[%s10 + $0x10] sm:$0xf]
    %v1571 = vld [vmem:[%s10 + $0x14] sm:$0xf]
    %v1572 = vld [vmem:[%s10 + $0x18] sm:$0xf]
    %v1573 = vld [vmem:[%s10 + $0x1c] sm:$0xf]
    %v1574 = vld [vmem:[%s10 + $0x20] sm:$0xf]
    %v1575 = vld [vmem:[%s10 + $0x24] sm:$0xf]
    %v1576 = vld [vmem:[%s10 + $0x28] sm:$0xf]
    %v1577 = vld [vmem:[%s10 + $0x2c] sm:$0xf]
    %v1578 = vld [vmem:[%s10 + $0x30] sm:$0xf]
    %v1579 = vld [vmem:[%s10 + $0x34] sm:$0xf]
    %v1580 = vld [vmem:[%s10 + $0x38] sm:$0xf]
    %v1581 = vld [vmem:[%s10 + $0x3c] sm:$0xf]
    %v1582 = vld [vmem:[%s10 + $0x40] sm:$0xf]
    %v1583 = vld [vmem:[%s10 + $0x44] sm:$0xf]
    %v1584 = vld [vmem:[%s10 + $0x48] sm:$0xf]
    %v1585 = vld [vmem:[%s10 + $0x4c] sm:$0xf]
    %v1586 = vld [vmem:[%s10 + $0x50] sm:$0xf]
    %v1587 = vld [vmem:[%s10 + $0x54] sm:$0xf]
    %v1588 = vld [vmem:[%s10 + $0x58] sm:$0xf]
    %v1589 = vld [vmem:[%s10 + $0x5c] sm:$0xf]
    %v1590 = vld [vmem:[%s10 + $0x60] sm:$0xf]
    %v1591 = vld [vmem:[%s10 + $0x64] sm:$0xf]
    %v1592 = vld [vmem:[%s10 + $0x68] sm:$0xf]
    %v1593 = vld [vmem:[%s10 + $0x6c] sm:$0xf]
    %v1594 = vld [vmem:[%s10 + $0x70] sm:$0xf]
    %v1595 = vld [vmem:[%s10 + $0x74] sm:$0xf]
    %v1596 = vld [vmem:[%s10 + $0x78] sm:$0xf]
    %v1597 = vld [vmem:[%s10 + $0x7c] sm:$0xf]
    %v1598 = vld [vmem:[%s10 + $0x80] sm:$0xf]
    %v1599 = vld [vmem:[%s10 + $0x84] sm:$0xf]
    %v1600 = vld [vmem:[%s10 + $0x88] sm:$0xf]
    %v1601 = vld [vmem:[%s10 + $0x8c] sm:$0xf]
    %v1602 = vld [vmem:[%s10 + $0x90] sm:$0xf]
    %v1603 = vld [vmem:[%s10 + $0x94] sm:$0xf]
    %v1604 = vld [vmem:[%s10 + $0x98] sm:$0xf]
    %v1605 = vld [vmem:[%s10 + $0x9c] sm:$0xf]
    %v1606 = vld [vmem:[%s10 + $0xa0] sm:$0xf]
    %v1607 = vld [vmem:[%s10 + $0xa4] sm:$0xf]
    %v1608 = vld [vmem:[%s10 + $0xa8] sm:$0xf]
    %v1609 = vld [vmem:[%s10 + $0xac] sm:$0xf]
    %v1610 = vld [vmem:[%s10 + $0xb0] sm:$0xf]
    %v1611 = vld [vmem:[%s10 + $0xb4] sm:$0xf]
    %v1612 = vld [vmem:[%s10 + $0xb8] sm:$0xf]
    %v1613 = vld [vmem:[%s10 + $0xbc] sm:$0xf]
    %v1614 = vld [vmem:[%s10 + $0xc0] sm:$0xf]
    %v1615 = vld [vmem:[%s10 + $0xc4] sm:$0xf]
    %v1616 = vld [vmem:[%s10 + $0xc8] sm:$0xf]
    %v1617 = vld [vmem:[%s10 + $0xcc] sm:$0xf]
    %v1618 = vld [vmem:[%s10 + $0xd0] sm:$0xf]
    %v1619 = vld [vmem:[%s10 + $0xd4] sm:$0xf]
    %v1620 = vld [vmem:[%s10 + $0xd8] sm:$0xf]
    %v1621 = vld [vmem:[%s10 + $0xdc] sm:$0xf]
    %v1622 = vld [vmem:[%s10 + $0xe0] sm:$0xf]
    %v1623 = vld [vmem:[%s10 + $0xe4] sm:$0xf]
    %v1624 = vld [vmem:[%s10 + $0xe8] sm:$0xf]
    %v1625 = vld [vmem:[%s10 + $0xec] sm:$0xf]
    %v1626 = vld [vmem:[%s10 + $0xf0] sm:$0xf]
    %v1627 = vld [vmem:[%s10 + $0xf4] sm:$0xf]
    %v1628 = vld [vmem:[%s10 + $0xf8] sm:$0xf]
    %v1629 = vld [vmem:[%s10 + $0xfc] sm:$0xf]
    %v1630 = vld [vmem:[%s10 + $0x100] sm:$0xf]
    %v1631 = vld [vmem:[%s10 + $0x104] sm:$0xf]
    %v1632 = vld [vmem:[%s10 + $0x108] sm:$0xf]
    %v1633 = vld [vmem:[%s10 + $0x10c] sm:$0xf]
    %v1634 = vld [vmem:[%s10 + $0x110] sm:$0xf]
    %v1635 = vld [vmem:[%s10 + $0x114] sm:$0xf]
    %v1636 = vld [vmem:[%s10 + $0x118] sm:$0xf]
    %v1637 = vld [vmem:[%s10 + $0x11c] sm:$0xf]
    %v1638 = vld [vmem:[%s10 + $0x120] sm:$0xf]
    %v1639 = vld [vmem:[%s10 + $0x124] sm:$0xf]
    %v1640 = vld [vmem:[%s10 + $0x128] sm:$0xf]
    %v1641 = vld [vmem:[%s10 + $0x12c] sm:$0xf]
    %v1642 = vld [vmem:[%s10 + $0x130] sm:$0xf]
    %v1643 = vld [vmem:[%s10 + $0x134] sm:$0xf]
    %v1644 = vld [vmem:[%s10 + $0x138] sm:$0xf]
    %v1645 = vld [vmem:[%s10 + $0x13c] sm:$0xf]
    %v1726 = vunpack.c.l.b16 %v1566
    %v1727 = vunpack.c.l.b16 %v1567
    %v1728 = vunpack.c.l.b16 %v1568
    %v1729 = vunpack.c.l.b16 %v1569
    %v1730 = vunpack.c.l.b16 %v1570
    %v1731 = vunpack.c.l.b16 %v1571
    %v1732 = vunpack.c.l.b16 %v1572
    %v1733 = vunpack.c.l.b16 %v1573
    %v1734 = vunpack.c.l.b16 %v1574
    %v1735 = vunpack.c.l.b16 %v1575
    %v1736 = vunpack.c.l.b16 %v1576
    %v1737 = vunpack.c.l.b16 %v1577
    %v1738 = vunpack.c.l.b16 %v1578
    %v1739 = vunpack.c.l.b16 %v1579
    %v1740 = vunpack.c.l.b16 %v1580
    %v1741 = vunpack.c.l.b16 %v1581
    %v1742 = vunpack.c.l.b16 %v1582
    %v1743 = vunpack.c.l.b16 %v1583
    %v1744 = vunpack.c.l.b16 %v1584
    %v1745 = vunpack.c.l.b16 %v1585
    %v1746 = vunpack.c.l.b16 %v1586
    %v1747 = vunpack.c.l.b16 %v1587
    %v1748 = vunpack.c.l.b16 %v1588
    %v1749 = vunpack.c.l.b16 %v1589
    %v1750 = vunpack.c.l.b16 %v1590
    %v1751 = vunpack.c.l.b16 %v1591
    %v1752 = vunpack.c.l.b16 %v1592
    %v1753 = vunpack.c.l.b16 %v1593
    %v1754 = vunpack.c.l.b16 %v1594
    %v1755 = vunpack.c.l.b16 %v1595
    %v1756 = vunpack.c.l.b16 %v1596
    %v1757 = vunpack.c.l.b16 %v1597
    %v1758 = vunpack.c.l.b16 %v1598
    %v1759 = vunpack.c.l.b16 %v1599
    %v1760 = vunpack.c.l.b16 %v1600
    %v1761 = vunpack.c.l.b16 %v1601
    %v1762 = vunpack.c.l.b16 %v1602
    %v1763 = vunpack.c.l.b16 %v1603
    %v1764 = vunpack.c.l.b16 %v1604
    %v1765 = vunpack.c.l.b16 %v1605
    %v1766 = vunpack.c.l.b16 %v1606
    %v1767 = vunpack.c.l.b16 %v1607
    %v1768 = vunpack.c.l.b16 %v1608
    %v1769 = vunpack.c.l.b16 %v1609
    %v1770 = vunpack.c.l.b16 %v1610
    %v1771 = vunpack.c.l.b16 %v1611
    %v1772 = vunpack.c.l.b16 %v1612
    %v1773 = vunpack.c.l.b16 %v1613
    %v1774 = vunpack.c.l.b16 %v1614
    %v1775 = vunpack.c.l.b16 %v1615
    %v1776 = vunpack.c.l.b16 %v1616
    %v1777 = vunpack.c.l.b16 %v1617
    %v1778 = vunpack.c.l.b16 %v1618
    %v1779 = vunpack.c.l.b16 %v1619
    %v1780 = vunpack.c.l.b16 %v1620
    %v1781 = vunpack.c.l.b16 %v1621
    %v1782 = vunpack.c.l.b16 %v1622
    %v1783 = vunpack.c.l.b16 %v1623
    %v1784 = vunpack.c.l.b16 %v1624
    %v1785 = vunpack.c.l.b16 %v1625
    %v1786 = vunpack.c.l.b16 %v1626
    %v1787 = vunpack.c.l.b16 %v1627
    %v1788 = vunpack.c.l.b16 %v1628
    %v1789 = vunpack.c.l.b16 %v1629
    %v1790 = vunpack.c.l.b16 %v1630
    %v1791 = vunpack.c.l.b16 %v1631
    %v1792 = vunpack.c.l.b16 %v1632
    %v1793 = vunpack.c.l.b16 %v1633
    %v1794 = vunpack.c.l.b16 %v1634
    %v1795 = vunpack.c.l.b16 %v1635
    %v1796 = vunpack.c.l.b16 %v1636
    %v1797 = vunpack.c.l.b16 %v1637
    %v1798 = vunpack.c.l.b16 %v1638
    %v1799 = vunpack.c.l.b16 %v1639
    %v1800 = vunpack.c.l.b16 %v1640
    %v1801 = vunpack.c.l.b16 %v1641
    %v1802 = vunpack.c.l.b16 %v1642
    %v1803 = vunpack.c.l.b16 %v1643
    %v1804 = vunpack.c.l.b16 %v1644
    %v1805 = vunpack.c.l.b16 %v1645
    %v1806 = vpack.c.b16 %v1727, %v1726
    %v1807 = vpack.c.b16 %v1729, %v1728
    %v1808 = vpack.c.b16 %v1731, %v1730
    %v1809 = vpack.c.b16 %v1733, %v1732
    %v1810 = vpack.c.b16 %v1735, %v1734
    %v1811 = vpack.c.b16 %v1737, %v1736
    %v1812 = vpack.c.b16 %v1739, %v1738
    %v1813 = vpack.c.b16 %v1741, %v1740
    %v1814 = vpack.c.b16 %v1743, %v1742
    %v1815 = vpack.c.b16 %v1745, %v1744
    %v1816 = vpack.c.b16 %v1747, %v1746
    %v1817 = vpack.c.b16 %v1749, %v1748
    %v1818 = vpack.c.b16 %v1751, %v1750
    %v1819 = vpack.c.b16 %v1753, %v1752
    %v1820 = vpack.c.b16 %v1755, %v1754
    %v1821 = vpack.c.b16 %v1757, %v1756
    %v1822 = vpack.c.b16 %v1759, %v1758
    %v1823 = vpack.c.b16 %v1761, %v1760
    %v1824 = vpack.c.b16 %v1763, %v1762
    %v1825 = vpack.c.b16 %v1765, %v1764
    %v1826 = vpack.c.b16 %v1767, %v1766
    %v1827 = vpack.c.b16 %v1769, %v1768
    %v1828 = vpack.c.b16 %v1771, %v1770
    %v1829 = vpack.c.b16 %v1773, %v1772
    %v1830 = vpack.c.b16 %v1775, %v1774
    %v1831 = vpack.c.b16 %v1777, %v1776
    %v1832 = vpack.c.b16 %v1779, %v1778
    %v1833 = vpack.c.b16 %v1781, %v1780
    %v1834 = vpack.c.b16 %v1783, %v1782
    %v1835 = vpack.c.b16 %v1785, %v1784
    %v1836 = vpack.c.b16 %v1787, %v1786
    %v1837 = vpack.c.b16 %v1789, %v1788
    %v1838 = vpack.c.b16 %v1791, %v1790
    %v1839 = vpack.c.b16 %v1793, %v1792
    %v1840 = vpack.c.b16 %v1795, %v1794
    %v1841 = vpack.c.b16 %v1797, %v1796
    %v1842 = vpack.c.b16 %v1799, %v1798
    %v1843 = vpack.c.b16 %v1801, %v1800
    %v1844 = vpack.c.b16 %v1803, %v1802
    %v1845 = vpack.c.b16 %v1805, %v1804
    %1886 = vmatprep.subr.bf16.mxu0 0
    %1887 = vmatpush1.bf16.msra.mxu0 %v1806
    %1888 = vmatprep.subr.bf16.mxu0 0
    %1889 = vmatpush1.bf16.msra.mxu0 %v1807
    %1890 = vmatprep.subr.bf16.mxu0 0
    %1891 = vmatpush1.bf16.msra.mxu0 %v1808
    %1892 = vmatprep.subr.bf16.mxu0 0
    %1893 = vmatpush1.bf16.msra.mxu0 %v1809
    %1894 = vmatprep.subr.bf16.mxu0 0
    %1895 = vmatpush1.bf16.msra.mxu0 %v1810
    %1896 = vmatprep.subr.bf16.mxu0 0
    %1897 = vmatpush1.bf16.msra.mxu0 %v1811
    %1898 = vmatprep.subr.bf16.mxu0 0
    %1899 = vmatpush1.bf16.msra.mxu0 %v1812
    %1900 = vmatprep.subr.bf16.mxu0 0
    %1901 = vmatpush1.bf16.msra.mxu0 %v1813
    %1902 = vmatprep.subr.bf16.mxu0 0
    %1903 = vmatpush1.bf16.msra.mxu0 %v1814
    %1904 = vmatprep.subr.bf16.mxu0 0
    %1905 = vmatpush1.bf16.msra.mxu0 %v1815
    %1906 = vmatprep.subr.bf16.mxu0 0
    %1907 = vmatpush1.bf16.msra.mxu0 %v1816
    %1908 = vmatprep.subr.bf16.mxu0 0
    %1909 = vmatpush1.bf16.msra.mxu0 %v1817
    %1910 = vmatprep.subr.bf16.mxu0 0
    %1911 = vmatpush1.bf16.msra.mxu0 %v1818
    %1912 = vmatprep.subr.bf16.mxu0 0
    %1913 = vmatpush1.bf16.msra.mxu0 %v1819
    %1914 = vmatprep.subr.bf16.mxu0 0
    %1915 = vmatpush1.bf16.msra.mxu0 %v1820
    %1916 = vmatprep.subr.bf16.mxu0 0
    %1917 = vmatpush1.bf16.msra.mxu0 %v1821
    %1918 = vmatprep.mubr.bf16.mxu0 %v1562
    %1919 = vmatmul.mubr.bf16.gmra.mrb[0].mxu0 %v1561
    %v1920 = vpop.f32.mrb[0].mxu0
    %v1921 = vadd.f32 0.0, %v1920
    %v1922 = vpop.f32.mrb[0].mxu0
    %v1923 = vpop.f32.mrb[0].mxu0
    %v1924 = vpop.f32.mrb[0].mxu0
    %1925 = vdwg.mxu0
    %1926 = vmatprep.subr.bf16.mxu0 0
    %1927 = vmatpush1.bf16.msra.mxu0 %v1822
    %1928 = vmatprep.subr.bf16.mxu0 0
    %1929 = vmatpush1.bf16.msra.mxu0 %v1823
    %1930 = vmatprep.subr.bf16.mxu0 0
    %1931 = vmatpush1.bf16.msra.mxu0 %v1824
    %1932 = vmatprep.subr.bf16.mxu0 0
    %1933 = vmatpush1.bf16.msra.mxu0 %v1825
    %1934 = vmatprep.subr.bf16.mxu0 0
    %1935 = vmatpush1.bf16.msra.mxu0 %v1826
    %1936 = vmatprep.subr.bf16.mxu0 0
    %1937 = vmatpush1.bf16.msra.mxu0 %v1827
    %1938 = vmatprep.subr.bf16.mxu0 0
    %1939 = vmatpush1.bf16.msra.mxu0 %v1828
    %1940 = vmatprep.subr.bf16.mxu0 0
    %1941 = vmatpush1.bf16.msra.mxu0 %v1829
    %1942 = vmatprep.subr.bf16.mxu0 0
    %1943 = vmatpush1.bf16.msra.mxu0 %v1830
    %1944 = vmatprep.subr.bf16.mxu0 0
    %1945 = vmatpush1.bf16.msra.mxu0 %v1831
    %1946 = vmatprep.subr.bf16.mxu0 0
    %1947 = vmatpush1.bf16.msra.mxu0 %v1832
    %1948 = vmatprep.subr.bf16.mxu0 0
    %1949 = vmatpush1.bf16.msra.mxu0 %v1833
    %1950 = vmatprep.subr.bf16.mxu0 0
    %1951 = vmatpush1.bf16.msra.mxu0 %v1834
    %1952 = vmatprep.subr.bf16.mxu0 0
    %1953 = vmatpush1.bf16.msra.mxu0 %v1835
    %1954 = vmatprep.subr.bf16.mxu0 0
    %1955 = vmatpush1.bf16.msra.mxu0 %v1836
    %1956 = vmatprep.subr.bf16.mxu0 0
    %1957 = vmatpush1.bf16.msra.mxu0 %v1837
    %1958 = vmatprep.mubr.bf16.mxu0 %v1564
    %1959 = vmatmul.mubr.bf16.gmra.mrb[0].mxu0 %v1563
    %v1960 = vpop.f32.mrb[0].mxu0
    %v1961 = vadd.f32 %v1921, %v1960
    %v1962 = vpop.f32.mrb[0].mxu0
    %v1963 = vpop.f32.mrb[0].mxu0
    %v1964 = vpop.f32.mrb[0].mxu0
    %1965 = vdwg.mxu0
    %1966 = vmatprep.subr.bf16.mxu0 0
    %1967 = vmatpush1.bf16.msra.mxu0 %v1838
    %1968 = vmatprep.subr.bf16.mxu0 0
    %1969 = vmatpush1.bf16.msra.mxu0 %v1839
    %1970 = vmatprep.subr.bf16.mxu0 0
    %1971 = vmatpush1.bf16.msra.mxu0 %v1840
    %1972 = vmatprep.subr.bf16.mxu0 0
    %1973 = vmatpush1.bf16.msra.mxu0 %v1841
    %1974 = vmatprep.subr.bf16.mxu0 0
    %1975 = vmatpush1.bf16.msra.mxu0 %v1842
    %1976 = vmatprep.subr.bf16.mxu0 0
    %1977 = vmatpush1.bf16.msra.mxu0 %v1843
    %1978 = vmatprep.subr.bf16.mxu0 0
    %1979 = vmatpush1.bf16.msra.mxu0 %v1844
    %1980 = vmatprep.subr.bf16.mxu0 0
    %1981 = vmatpush1.bf16.msra.mxu0 %v1845
    %1982 = vmatprep.subr.bf16.mxu0 0
    %1983 = vmatpush1.bf16.msra.mxu0 0
    %1984 = vmatprep.subr.bf16.mxu0 0
    %1985 = vmatpush1.bf16.msra.mxu0 0
    %1986 = vmatprep.subr.bf16.mxu0 0
    %1987 = vmatpush1.bf16.msra.mxu0 0
    %1988 = vmatprep.subr.bf16.mxu0 0
    %1989 = vmatpush1.bf16.msra.mxu0 0
    %1990 = vmatprep.subr.bf16.mxu0 0
    %1991 = vmatpush1.bf16.msra.mxu0 0
    %1992 = vmatprep.subr.bf16.mxu0 0
    %1993 = vmatpush1.bf16.msra.mxu0 0
    %1994 = vmatprep.subr.bf16.mxu0 0
    %1995 = vmatpush1.bf16.msra.mxu0 0
    %1996 = vmatprep.subr.bf16.mxu0 0
    %1997 = vmatpush1.bf16.msra.mxu0 0
    %1998 = vmatprep.mubr.bf16.mxu0 0
    %1999 = vmatmul.mubr.bf16.gmra.mrb[0].mxu0 %v1565
    %v2000 = vpop.f32.mrb[0].mxu0
    %v2001 = vadd.f32 %v1961, %v2000
    %v2002 = vpop.f32.mrb[0].mxu0
    %v2003 = vpop.f32.mrb[0].mxu0
    %v2004 = vpop.f32.mrb[0].mxu0
    %2005 = vdwg.mxu0
    %v2006 = vrot.slane %v2001, 4
    %v2007 = vadd.f32 %v2001, %v2006
    %v2008 = vrot.slane %v2007, 2
    %v2009 = vadd.f32 %v2007, %v2008
    %v2010 = vrot.slane %v2009, 1
    %v2011 = vadd.f32 %v2009, %v2010
    %v2012 = vmul.f32 %v2001, %v2001
    %v2013 = vrot.slane %v2012, 4
    %v2014 = vadd.f32 %v2012, %v2013
    %v2015 = vrot.slane %v2014, 2
    %v2016 = vadd.f32 %v2014, %v2015
    %v2017 = vrot.slane %v2016, 1
    %v2018 = vadd.f32 %v2016, %v2017
    %2019 = vrot.lane.b32.xlu0 %v2011, 32
    %v2020 = vpop.permute.xlu0 %2019
    %v2021 = vadd.f32 %v2011, %v2020
    %2022 = vrot.lane.b32.xlu0 %v2018, 32
    %v2023 = vpop.permute.xlu0 %2022
    %v2024 = vadd.f32 %v2018, %v2023
    %2025 = vrot.lane.b32.xlu0 %v2021, 64
    %v2026 = vpop.permute.xlu0 %2025
    %v2027 = vadd.f32 %v2021, %v2026
    %2028 = vrot.lane.b32.xlu0 %v2024, 64
    %v2029 = vpop.permute.xlu0 %2028
    %v2030 = vadd.f32 %v2024, %v2029
    %v2031 = vmul.f32 %v2027, 0.03125
    %v2032 = vmul.f32 %v2030, 0.03125
    %v2033 = vmul.f32 %v2031, %v2031
    %v2034 = vsub.f32 %v2032, %v2033
    %v2035 = vld [vmem:[%s11] sm:$0x1]
    %v2036 = vadd.f32 %v2034, 1e-05
    %v2037 = vrsqrt.pop %v2036
    %v2038 = vmul.f32 %v2035, %v2037
    %v2039 = vld [vmem:[%s12] sm:$0x1]
    %v2040 = vmul.f32 %v2031, %v2038
    %v2041 = vsub.f32 %v2039, %v2040
    %v2043 = vlaneseq
    %v2044 = vshrl.u32 %v2043, 7
    %v2045 = vsub.s32 0, %v2044
    %v2046 = vrot.slane %v2038, %v2045
    %v2048 = vmul.f32 %v2001, %v2046
    %v2050 = vlaneseq
    %v2051 = vshrl.u32 %v2050, 7
    %v2052 = vsub.s32 0, %v2051
    %v2053 = vrot.slane %v2041, %v2052
    %v2055 = vadd.f32 %v2048, %v2053
    %v2056 = vmax.f32 %v2055, 0.0
    %v2057 = vpack.c.bf16 %v2056, %v2056
    %v2058 = vld [vmem:[%s13] sm:$0x1]
    %vm2059 = vcmask 64512
    %v2061 = vsel %vm2059, %v2058, 0
    %vm2063 = vcmask 1043456
    %v2065 = vsel %vm2063, %v2057, 0
    %2067 = vmatprep.subr.bf16.mxu0 0
    %2068 = vmatpush1.bf16.msra.mxu0 %v2065
    %2069 = vmatprep.subr.bf16.mxu0 0
    %2070 = vmatpush1.bf16.msra.mxu0 0
    %2071 = vmatprep.subr.bf16.mxu0 0
    %2072 = vmatpush1.bf16.msra.mxu0 0
    %2073 = vmatprep.subr.bf16.mxu0 0
    %2074 = vmatpush1.bf16.msra.mxu0 0
    %2075 = vmatprep.subr.bf16.mxu0 0
    %2076 = vmatpush1.bf16.msra.mxu0 0
    %2077 = vmatprep.subr.bf16.mxu0 0
    %2078 = vmatpush1.bf16.msra.mxu0 0
    %2079 = vmatprep.subr.bf16.mxu0 0
    %2080 = vmatpush1.bf16.msra.mxu0 0
    %2081 = vmatprep.subr.bf16.mxu0 0
    %2082 = vmatpush1.bf16.msra.mxu0 0
    %2083 = vmatprep.subr.bf16.mxu0 0
    %2084 = vmatpush1.bf16.msra.mxu0 0
    %2085 = vmatprep.subr.bf16.mxu0 0
    %2086 = vmatpush1.bf16.msra.mxu0 0
    %2087 = vmatprep.subr.bf16.mxu0 0
    %2088 = vmatpush1.bf16.msra.mxu0 0
    %2089 = vmatprep.subr.bf16.mxu0 0
    %2090 = vmatpush1.bf16.msra.mxu0 0
    %2091 = vmatprep.subr.bf16.mxu0 0
    %2092 = vmatpush1.bf16.msra.mxu0 0
    %2093 = vmatprep.subr.bf16.mxu0 0
    %2094 = vmatpush1.bf16.msra.mxu0 0
    %2095 = vmatprep.subr.bf16.mxu0 0
    %2096 = vmatpush1.bf16.msra.mxu0 0
    %2097 = vmatprep.subr.bf16.mxu0 0
    %2098 = vmatpush1.bf16.msra.mxu0 0
    %2099 = vmatprep.mubr.bf16.mxu0 0
    %2100 = vmatmul.mubr.bf16.gmra.mrb[0].mxu0 %v2061
    %v2101 = vpop.f32.mrb[0].mxu0
    %v2102 = vadd.f32 0.0, %v2101
    %v2103 = vpop.f32.mrb[0].mxu0
    %v2104 = vpop.f32.mrb[0].mxu0
    %v2105 = vpop.f32.mrb[0].mxu0
    %2106 = vdwg.mxu0
    %v2107 = vpack.c.bf16 %v2102, %v2102
    %v2108 = vld [vmem:[%s14] sm:$0xf]
    %v2109 = vld [vmem:[%s14 + $0x4] sm:$0xf]
    %v2110 = vld [vmem:[%s14 + $0x8] sm:$0xf]
    %v2111 = vld [vmem:[%s14 + $0xc] sm:$0xf]
    %v2112 = vld [vmem:[%s14 + $0x10] sm:$0xf]
    %v2113 = vld [vmem:[%s14 + $0x14] sm:$0xf]
    %v2114 = vld [vmem:[%s14 + $0x18] sm:$0xf]
    %v2115 = vld [vmem:[%s14 + $0x1c] sm:$0xf]
    %v2116 = vld [vmem:[%s14 + $0x20] sm:$0xf]
    %v2117 = vld [vmem:[%s14 + $0x24] sm:$0xf]
    %v2118 = vld [vmem:[%s14 + $0x28] sm:$0xf]
    %v2119 = vld [vmem:[%s14 + $0x2c] sm:$0xf]
    %v2120 = vld [vmem:[%s14 + $0x30] sm:$0xf]
    %v2121 = vld [vmem:[%s14 + $0x34] sm:$0xf]
    %v2122 = vld [vmem:[%s14 + $0x38] sm:$0xf]
    %v2123 = vld [vmem:[%s14 + $0x3c] sm:$0xf]
    %v2124 = vld [vmem:[%s15] sm:$0x1]
    %v2126 = vlaneseq
    %v2127 = vshrl.u32 %v2126, 7
    %v2128 = vsub.s32 0, %v2127
    %v2129 = vrot.slane %v2124, %v2128
    %v2147 = vunpack.c.l.b16 %v2108
    %v2148 = vunpack.c.l.b16 %v2109
    %v2149 = vunpack.c.l.b16 %v2110
    %v2150 = vunpack.c.l.b16 %v2111
    %v2151 = vunpack.c.l.b16 %v2112
    %v2152 = vunpack.c.l.b16 %v2113
    %v2153 = vunpack.c.l.b16 %v2114
    %v2154 = vunpack.c.l.b16 %v2115
    %v2155 = vunpack.c.l.b16 %v2116
    %v2156 = vunpack.c.l.b16 %v2117
    %v2157 = vunpack.c.l.b16 %v2118
    %v2158 = vunpack.c.l.b16 %v2119
    %v2159 = vunpack.c.l.b16 %v2120
    %v2160 = vunpack.c.l.b16 %v2121
    %v2161 = vunpack.c.l.b16 %v2122
    %v2162 = vunpack.c.l.b16 %v2123
    %v2163 = vpack.c.b16 %v2148, %v2147
    %v2164 = vpack.c.b16 %v2150, %v2149
    %v2165 = vpack.c.b16 %v2152, %v2151
    %v2166 = vpack.c.b16 %v2154, %v2153
    %v2167 = vpack.c.b16 %v2156, %v2155
    %v2168 = vpack.c.b16 %v2158, %v2157
    %v2169 = vpack.c.b16 %v2160, %v2159
    %v2170 = vpack.c.b16 %v2162, %v2161
    %2179 = vmatprep.subr.bf16.mxu0 0
    %2180 = vmatpush1.bf16.msra.mxu0 %v2163
    %2181 = vmatprep.subr.bf16.mxu0 0
    %2182 = vmatpush1.bf16.msra.mxu0 %v2164
    %2183 = vmatprep.subr.bf16.mxu0 0
    %2184 = vmatpush1.bf16.msra.mxu0 %v2165
    %2185 = vmatprep.subr.bf16.mxu0 0
    %2186 = vmatpush1.bf16.msra.mxu0 %v2166
    %2187 = vmatprep.subr.bf16.mxu0 0
    %2188 = vmatpush1.bf16.msra.mxu0 %v2167
    %2189 = vmatprep.subr.bf16.mxu0 0
    %2190 = vmatpush1.bf16.msra.mxu0 %v2168
    %2191 = vmatprep.subr.bf16.mxu0 0
    %2192 = vmatpush1.bf16.msra.mxu0 %v2169
    %2193 = vmatprep.subr.bf16.mxu0 0
    %2194 = vmatpush1.bf16.msra.mxu0 %v2170
    %2195 = vmatprep.subr.bf16.mxu0 0
    %2196 = vmatpush1.bf16.msra.mxu0 0
    %2197 = vmatprep.subr.bf16.mxu0 0
    %2198 = vmatpush1.bf16.msra.mxu0 0
    %2199 = vmatprep.subr.bf16.mxu0 0
    %2200 = vmatpush1.bf16.msra.mxu0 0
    %2201 = vmatprep.subr.bf16.mxu0 0
    %2202 = vmatpush1.bf16.msra.mxu0 0
    %2203 = vmatprep.subr.bf16.mxu0 0
    %2204 = vmatpush1.bf16.msra.mxu0 0
    %2205 = vmatprep.subr.bf16.mxu0 0
    %2206 = vmatpush1.bf16.msra.mxu0 0
    %2207 = vmatprep.subr.bf16.mxu0 0
    %2208 = vmatpush1.bf16.msra.mxu0 0
    %2209 = vmatprep.subr.bf16.mxu0 0
    %2210 = vmatpush1.bf16.msra.mxu0 0
    %2211 = vmatprep.mubr.bf16.mxu0 0
    %2212 = vmatmul.mubr.bf16.gmra.mrb[0].mxu0 %v2107
    %v2213 = vpop.f32.mrb[0].mxu0
    %v2214 = vadd.f32 %v2129, %v2213
    %v2215 = vpop.f32.mrb[0].mxu0
    %v2216 = vpop.f32.mrb[0].mxu0
    %v2217 = vpop.f32.mrb[0].mxu0
    %2218 = vdwg.mxu0
    %v2219 = vtanh.pop %v2214
    %2220 = vst [vmem:[#allocation2] sm:$0x3] %v2219
    // Predicated region
    $region66: #{latent_state_encoder_forward.1} parent=1 // pred_check
      _
    $region67: #{latent_state_encoder_forward.1} parent=1 // pred_check_branch
      %2222 = sbr.rel (0) target = $region69
    $region68: #{latent_state_encoder_forward.1} parent=1 // pred_region
      %s2224 = ssub.s32 32, 32
      %2225 = vsyncadd [#allocation3], %s2224
      %s2227 = sshll.u32 [#allocation2], 4
      %s2228 = int_to_ptr.vmem [resolvable:$true] %s2227
      %2230 = dma.vmem_to_hbm [thread:$0]  %s2228, 32, %s16, [#allocation3]
    $region69: #{latent_state_encoder_forward.1} parent=1 // pred_fallthru
      _
    // Predicated region
    $region70: #{latent_state_encoder_forward.1} parent=1 // pred_check
      _
    $region71: #{latent_state_encoder_forward.1} parent=1 // pred_check_branch
      %2232 = sbr.rel (0) target = $region73
    $region72: #{latent_state_encoder_forward.1} parent=1 // pred_region
      %2233 = dma.done [#allocation3], 32
    $region73: #{latent_state_encoder_forward.1} parent=1 // pred_fallthru
      _
    %2234 = vsyncpa [#allocation3], 1

</llo_original>
